<compile_context>
chip_gen: v7x
topology: tpu7x:2x2x1
jax: 0.10.0
libtpu: 0.0.40
codegen_flags: <defaults>
</compile_context>

<pallas_src>
import jax
import jax.numpy as jnp
from jax.experimental import pallas as pl
from jax.experimental.pallas import tpu as pltpu


IN_DIM = 28 * 28   # 784
HID = 128
LATENT = 64

# Whether pipeline_mode=pl.Buffered(1) is available / accepted by the lowering.
# Flipped off at runtime (with a plain-spec retry) if the first attempt fails.
_SINGLE_BUFFER_WEIGHTS_OK = hasattr(pl, "Buffered")


def _round_up(x, m):
    return (x + m - 1) // m * m


def autoencoder_kernel(x_ref,
                       we1_ref, be1_ref,     # encoder Linear(784, 128)
                       wmid_ref, bmid_ref,   # fused Linear(128,64) @ Linear(64,128)
                       wd2_ref, bd2_ref,     # decoder Linear(128, 784)
                       out_ref):
    cdt = we1_ref.dtype  # compute dtype of the matmul operands

    # In-kernel cast of the streamed x tile (no-op if x already == cdt).
    x = x_ref[...].astype(cdt)

    # Layer 1: (block_b, 784) @ (784, 128) on the MXU, f32 accumulation,
    # bias-add + ReLU epilogue in f32.
    h = jnp.dot(x, we1_ref[...], preferred_element_type=jnp.float32) + be1_ref[...]
    h = jnp.maximum(h, 0.0)

    # Fused latent layers (no activation on the 64-d latent in the original
    # module): single lane-dense 128x128 matmul, ReLU in f32.
    g = jnp.dot(h.astype(cdt), wmid_ref[...],
                preferred_element_type=jnp.float32) + bmid_ref[...]
    g = jnp.maximum(g, 0.0)

    # Decoder output layer: (block_b, 128) @ (128, 784).
    y = jnp.dot(g.astype(cdt), wd2_ref[...],
                preferred_element_type=jnp.float32) + bd2_ref[...]
    out_ref[...] = y.astype(out_ref.dtype)


def init_params(key):
    """Deterministic init matching the PyTorch module shapes.

    Weights are stored transposed relative to PyTorch, i.e. (in, out)."""
    ks = jax.random.split(key, 8)

    def linear(kw, kb, fan_in, fan_out):
        bound = 1.0 / jnp.sqrt(jnp.float32(fan_in))
        w = jax.random.uniform(kw, (fan_in, fan_out), jnp.float32, -bound, bound)
        b = jax.random.uniform(kb, (1, fan_out), jnp.float32, -bound, bound)
        return w, b

    we1, be1 = linear(ks[0], ks[1], IN_DIM, HID)     # encoder Linear(784, 128)
    we2, be2 = linear(ks[2], ks[3], HID, LATENT)     # encoder Linear(128, 64)
    wd1, bd1 = linear(ks[4], ks[5], LATENT, HID)     # decoder Linear(64, 128)
    wd2, bd2 = linear(ks[6], ks[7], HID, IN_DIM)     # decoder Linear(128, 784)
    return (we1, be1, we2, be2, wd1, bd1, wd2, bd2)


def prepare_params(params, compute_dtype=jnp.bfloat16):
    """One-time parameter prep (hoisted out of the per-call wrapper).

    Fuses the two latent linears (no nonlinearity between them):
        g_pre = (h @ we2 + be2) @ wd1 + bd1 = h @ (we2 @ wd1) + (be2 @ wd1 + bd1)
    and casts matmul operands to compute_dtype (bf16 is MXU-native on v5e, v6e
    and v7x). Biases stay f32 for the f32 epilogue.
    """
    we1, be1, we2, be2, wd1, bd1, wd2, bd2 = params
    w_mid = jnp.dot(we2, wd1, preferred_element_type=jnp.float32)        # (128, 128)
    b_mid = jnp.dot(be2, wd1, preferred_element_type=jnp.float32) + bd1  # (1, 128)
    cdt = jnp.dtype(compute_dtype)
    return (we1.astype(cdt), be1.astype(jnp.float32),
            w_mid.astype(cdt), b_mid.astype(jnp.float32),
            wd2.astype(cdt), bd2.astype(jnp.float32))


def autoencoder_forward(x, prepared_params, *, block_b=512, out_dtype=None,
                        vmem_limit_bytes=48 * 1024 * 1024):
    """x: (B, 1, 28, 28) or any (B, ...) flattening to 784 per row.

    prepared_params: output of prepare_params(...) (call once, reuse).
    out_dtype: output dtype (default: x.dtype); bf16 halves the output stream.
    block_b: batch rows per grid step.  Tuning: v6e/v5e (128 MiB VMEM) can go
      1024-2048 with a larger vmem_limit_bytes; v7x (64 MiB/TC) keep <= ~1024
      and vmem_limit_bytes <= ~48 MiB.  It is additionally capped so the grid
      has >= 2 steps whenever possible (megacore sharding on v7x).
    """
    we1_c, be1, wmid_c, bmid, wd2_c, bd2 = prepared_params
    B = x.shape[0]
    x_flat = x.reshape(B, -1)                 # == x.view(B, -1); layout bitcast, no HBM pass
    assert x_flat.shape[1] == IN_DIM
    out_dtype = x.dtype if out_dtype is None else jnp.dtype(out_dtype)

    # Batch tiling: sublane-aligned, and >= 2 grid steps when B allows it.
    block_b = max(8, min(block_b, _round_up(pl.cdiv(B, 2), 8)))
    grid = (pl.cdiv(B, block_b),)             # partial last block handled by the pipeline

    in_item = jnp.dtype(x_flat.dtype).itemsize
    out_item = jnp.dtype(out_dtype).itemsize
    w_item = jnp.dtype(we1_c.dtype).itemsize
    weight_elems = IN_DIM * HID + HID * HID + HID * IN_DIM
    cost = pl.CostEstimate(
        flops=2 * B * weight_elems,
        transcendentals=0,
        bytes_accessed=(B * IN_DIM * in_item            # x read
                        + B * IN_DIM * out_item         # out write
                        + weight_elems * w_item         # weights (read once)
                        + (HID + HID + IN_DIM) * 4),    # biases (f32)
    )

    const = lambda i: (0, 0)   # weights/biases: resident across grid steps

    def build_and_run(single_buffer_weights):
        def wspec(shape):
            if single_buffer_weights:
                # Block index never changes -> a second pipeline buffer is useless.
                return pl.BlockSpec(shape, const, pipeline_mode=pl.Buffered(1))
            return pl.BlockSpec(shape, const)

        return pl.pallas_call(
            autoencoder_kernel,
            out_shape=jax.ShapeDtypeStruct((B, IN_DIM), out_dtype),
            grid=grid,
            in_specs=[
                pl.BlockSpec((block_b, IN_DIM), lambda i: (i, 0)),   # x tile (streamed)
                wspec((IN_DIM, HID)),                                # we1
                wspec((1, HID)),                                     # be1 (f32)
                wspec((HID, HID)),                                   # w_mid (fused)
                wspec((1, HID)),                                     # b_mid (f32)
                wspec((HID, IN_DIM)),                                # wd2
                wspec((1, IN_DIM)),                                  # bd2 (f32)
            ],
            out_specs=pl.BlockSpec((block_b, IN_DIM), lambda i: (i, 0)),
            compiler_params=pltpu.CompilerParams(
                dimension_semantics=("parallel",),                   # megacore on v7x
                vmem_limit_bytes=vmem_limit_bytes,
            ),
            cost_estimate=cost,
        )(x_flat, we1_c, be1, wmid_c, bmid, wd2_c, bd2)

    global _SINGLE_BUFFER_WEIGHTS_OK
    if _SINGLE_BUFFER_WEIGHTS_OK:
        try:
            return build_and_run(True)
        except Exception:
            # pipeline_mode / Buffered(1) unsupported on this JAX build: fall back.
            _SINGLE_BUFFER_WEIGHTS_OK = False
    return build_and_run(False)


def autoencoder_reference(x, params):
    """Pure-JAX reference with the original (unfused) layer structure."""
    we1, be1, we2, be2, wd1, bd1, wd2, bd2 = params
    B = x.shape[0]
    xf = x.reshape(B, -1).astype(jnp.float32)
    h = jnp.maximum(xf @ we1 + be1, 0.0)
    z = h @ we2 + be2                      # 64-d latent, no activation
    g = jnp.maximum(z @ wd1 + bd1, 0.0)
    return g @ wd2 + bd2


if __name__ == "__main__":
    key = jax.random.PRNGKey(0)
    k_params, k_x = jax.random.split(key)

    params = init_params(k_params)

    # NCHW input like a small MNIST batch: (batch=2, channels=1, 28, 28).
    x = jax.random.normal(k_x, (2, 1, 28, 28), dtype=jnp.float32)
    y_ref = autoencoder_reference(x, params)

    # f32 compute / f32 output path (matches reference up to fused-matmul rounding).
    prep_f32 = prepare_params(params, compute_dtype=jnp.float32)
    y_f32 = jax.block_until_ready(autoencoder_forward(x, prep_f32))
    assert y_f32.shape == (2, IN_DIM)
    assert y_f32.dtype == jnp.float32
    assert jnp.allclose(y_f32, y_ref, atol=1e-4, rtol=1e-4)

    # bf16 operands (x tile cast in-kernel from f32) + bf16 output stream.
    prep_bf16 = prepare_params(params, compute_dtype=jnp.bfloat16)
    y_bf16 = jax.block_until_ready(
        autoencoder_forward(x, prep_bf16, out_dtype=jnp.bfloat16))
    assert y_bf16.dtype == jnp.bfloat16
    assert jnp.allclose(y_bf16.astype(jnp.float32), y_ref, atol=1e-1, rtol=1e-1)

    # Larger batch: non-divisible B exercising a 2-step grid + masked partial
    # last block (no wrapper-side pad/slice).
    xb = jax.random.normal(jax.random.PRNGKey(1), (50, 1, 28, 28), jnp.float32)
    yb = jax.block_until_ready(autoencoder_forward(xb, prep_f32, block_b=32))
    assert yb.shape == (50, IN_DIM)
    assert jnp.allclose(yb, autoencoder_reference(xb, params), atol=1e-4, rtol=1e-4)

    print("KERNEL_OK")
</pallas_src>

<mosaic_0001>
module attributes {stable_mosaic.version = 11 : i64} {
  func.func @autoencoder_kernel(%arg0: i32, %arg1: memref<8x784xf32, #tpu.memory_space<vmem>>, %arg2: memref<784x128xf32, #tpu.memory_space<vmem>>, %arg3: memref<1x128xf32, #tpu.memory_space<vmem>>, %arg4: memref<128x128xf32, #tpu.memory_space<vmem>>, %arg5: memref<1x128xf32, #tpu.memory_space<vmem>>, %arg6: memref<128x784xf32, #tpu.memory_space<vmem>>, %arg7: memref<1x784xf32, #tpu.memory_space<vmem>>, %arg8: memref<8x784xf32, #tpu.memory_space<vmem>>) attributes {dimension_semantics = [#tpu.dimension_semantics<parallel>], iteration_bounds = array<i64: 1>, scalar_prefetch = 0 : i64, scratch_operands = 0 : i64, tpu.core_type = #tpu.core_type<tc>, window_params = [{transform_indices = @transform_0, window_bounds = array<i64: 8, 784>}, {pipeline_mode = #tpu.pipeline_mode<synchronous>, transform_indices = @transform_1, window_bounds = array<i64: 784, 128>}, {pipeline_mode = #tpu.pipeline_mode<synchronous>, transform_indices = @transform_2, window_bounds = array<i64: 1, 128>}, {pipeline_mode = #tpu.pipeline_mode<synchronous>, transform_indices = @transform_3, window_bounds = array<i64: 128, 128>}, {pipeline_mode = #tpu.pipeline_mode<synchronous>, transform_indices = @transform_4, window_bounds = array<i64: 1, 128>}, {pipeline_mode = #tpu.pipeline_mode<synchronous>, transform_indices = @transform_5, window_bounds = array<i64: 128, 784>}, {pipeline_mode = #tpu.pipeline_mode<synchronous>, transform_indices = @transform_6, window_bounds = array<i64: 1, 784>}, {transform_indices = @transform_7, window_bounds = array<i64: 8, 784>}]} {
    %c0 = arith.constant 0 : index
    %c0_0 = arith.constant 0 : index
    %0 = vector.load %arg1[%c0, %c0_0] : memref<8x784xf32, #tpu.memory_space<vmem>>, vector<8x784xf32>
    %c0_1 = arith.constant 0 : index
    %c0_2 = arith.constant 0 : index
    %1 = vector.load %arg2[%c0_1, %c0_2] : memref<784x128xf32, #tpu.memory_space<vmem>>, vector<784x128xf32>
    %cst = arith.constant dense<0.000000e+00> : vector<8x128xf32>
    %2 = tpu.matmul %0, %1, %cst {dimension_numbers = #tpu.dot_dimension_numbers<[1], [0], [0], [1], [0, 0, 1, 1], [], []>} : vector<8x784xf32>, vector<784x128xf32>, vector<8x128xf32> -> vector<8x128xf32>
    %c0_3 = arith.constant 0 : index
    %c0_4 = arith.constant 0 : index
    %3 = vector.load %arg3[%c0_3, %c0_4] : memref<1x128xf32, #tpu.memory_space<vmem>>, vector<1x128xf32>
    %4 = vector.broadcast %3 : vector<1x128xf32> to vector<8x128xf32>
    %5 = arith.addf %2, %4 : vector<8x128xf32>
    %cst_5 = arith.constant 0.000000e+00 : f32
    %6 = vector.broadcast %cst_5 : f32 to vector<8x128xf32>
    %7 = arith.maximumf %5, %6 : vector<8x128xf32>
    %c0_6 = arith.constant 0 : index
    %c0_7 = arith.constant 0 : index
    %8 = vector.load %arg4[%c0_6, %c0_7] : memref<128x128xf32, #tpu.memory_space<vmem>>, vector<128x128xf32>
    %cst_8 = arith.constant dense<0.000000e+00> : vector<8x128xf32>
    %9 = tpu.matmul %7, %8, %cst_8 {dimension_numbers = #tpu.dot_dimension_numbers<[1], [0], [0], [1], [0, 0, 1, 1], [], []>} : vector<8x128xf32>, vector<128x128xf32>, vector<8x128xf32> -> vector<8x128xf32>
    %c0_9 = arith.constant 0 : index
    %c0_10 = arith.constant 0 : index
    %10 = vector.load %arg5[%c0_9, %c0_10] : memref<1x128xf32, #tpu.memory_space<vmem>>, vector<1x128xf32>
    %11 = vector.broadcast %10 : vector<1x128xf32> to vector<8x128xf32>
    %12 = arith.addf %9, %11 : vector<8x128xf32>
    %cst_11 = arith.constant 0.000000e+00 : f32
    %13 = vector.broadcast %cst_11 : f32 to vector<8x128xf32>
    %14 = arith.maximumf %12, %13 : vector<8x128xf32>
    %c0_12 = arith.constant 0 : index
    %c0_13 = arith.constant 0 : index
    %15 = vector.load %arg6[%c0_12, %c0_13] : memref<128x784xf32, #tpu.memory_space<vmem>>, vector<128x784xf32>
    %cst_14 = arith.constant dense<0.000000e+00> : vector<8x784xf32>
    %16 = tpu.matmul %14, %15, %cst_14 {dimension_numbers = #tpu.dot_dimension_numbers<[1], [0], [0], [1], [0, 0, 1, 1], [], []>} : vector<8x128xf32>, vector<128x784xf32>, vector<8x784xf32> -> vector<8x784xf32>
    %c0_15 = arith.constant 0 : index
    %c0_16 = arith.constant 0 : index
    %17 = vector.load %arg7[%c0_15, %c0_16] : memref<1x784xf32, #tpu.memory_space<vmem>>, vector<1x784xf32>
    %18 = vector.broadcast %17 : vector<1x784xf32> to vector<8x784xf32>
    %19 = arith.addf %16, %18 : vector<8x784xf32>
    %c0_17 = arith.constant 0 : index
    %c0_18 = arith.constant 0 : index
    %20 = vector.load %arg8[%c0_17, %c0_18] : memref<8x784xf32, #tpu.memory_space<vmem>>, vector<8x784xf32>
    tpu.vector_store %arg8[%c0_17, %c0_18], %19 {strides = array<i32>} : memref<8x784xf32, #tpu.memory_space<vmem>>, vector<8x784xf32>,
    return
  }
  func.func @transform_0(%arg0: i32) -> (i32, i32) {
    %c0_i32 = arith.constant 0 : i32
    %c0_i32_0 = arith.constant 0 : i32
    return %arg0, %c0_i32 : i32, i32
  }
  func.func @transform_1(%arg0: i32) -> (i32, i32) {
    %c0_i32 = arith.constant 0 : i32
    %c0_i32_0 = arith.constant 0 : i32
    %c0_i32_1 = arith.constant 0 : i32
    return %c0_i32, %c0_i32_0 : i32, i32
  }
  func.func @transform_2(%arg0: i32) -> (i32, i32) {
    %c0_i32 = arith.constant 0 : i32
    %c0_i32_0 = arith.constant 0 : i32
    %c0_i32_1 = arith.constant 0 : i32
    return %c0_i32, %c0_i32_0 : i32, i32
  }
  func.func @transform_3(%arg0: i32) -> (i32, i32) {
    %c0_i32 = arith.constant 0 : i32
    %c0_i32_0 = arith.constant 0 : i32
    %c0_i32_1 = arith.constant 0 : i32
    return %c0_i32, %c0_i32_0 : i32, i32
  }
  func.func @transform_4(%arg0: i32) -> (i32, i32) {
    %c0_i32 = arith.constant 0 : i32
    %c0_i32_0 = arith.constant 0 : i32
    %c0_i32_1 = arith.constant 0 : i32
    return %c0_i32, %c0_i32_0 : i32, i32
  }
  func.func @transform_5(%arg0: i32) -> (i32, i32) {
    %c0_i32 = arith.constant 0 : i32
    %c0_i32_0 = arith.constant 0 : i32
    %c0_i32_1 = arith.constant 0 : i32
    return %c0_i32, %c0_i32_0 : i32, i32
  }
  func.func @transform_6(%arg0: i32) -> (i32, i32) {
    %c0_i32 = arith.constant 0 : i32
    %c0_i32_0 = arith.constant 0 : i32
    %c0_i32_1 = arith.constant 0 : i32
    return %c0_i32, %c0_i32_0 : i32, i32
  }
  func.func @transform_7(%arg0: i32) -> (i32, i32) {
    %c0_i32 = arith.constant 0 : i32
    %c0_i32_0 = arith.constant 0 : i32
    return %arg0, %c0_i32 : i32, i32
  }
}

module attributes {stable_mosaic.version = 11 : i64} {
  func.func @autoencoder_kernel(%arg0: i32, %arg1: memref<8x784xf32, #tpu.memory_space<vmem>>, %arg2: memref<784x128xf32, #tpu.memory_space<vmem>>, %arg3: memref<1x128xf32, #tpu.memory_space<vmem>>, %arg4: memref<128x128xf32, #tpu.memory_space<vmem>>, %arg5: memref<1x128xf32, #tpu.memory_space<vmem>>, %arg6: memref<128x784xf32, #tpu.memory_space<vmem>>, %arg7: memref<1x784xf32, #tpu.memory_space<vmem>>, %arg8: memref<8x784xf32, #tpu.memory_space<vmem>>) attributes {dimension_semantics = [#tpu.dimension_semantics<parallel>], iteration_bounds = array<i64: 1>, scalar_prefetch = 0 : i64, scratch_operands = 0 : i64, tpu.core_type = #tpu.core_type<tc>, window_params = [{transform_indices = @transform_0, window_bounds = array<i64: 8, 784>}, {pipeline_mode = #tpu.pipeline_mode<synchronous>, transform_indices = @transform_1, window_bounds = array<i64: 784, 128>}, {pipeline_mode = #tpu.pipeline_mode<synchronous>, transform_indices = @transform_2, window_bounds = array<i64: 1, 128>}, {pipeline_mode = #tpu.pipeline_mode<synchronous>, transform_indices = @transform_3, window_bounds = array<i64: 128, 128>}, {pipeline_mode = #tpu.pipeline_mode<synchronous>, transform_indices = @transform_4, window_bounds = array<i64: 1, 128>}, {pipeline_mode = #tpu.pipeline_mode<synchronous>, transform_indices = @transform_5, window_bounds = array<i64: 128, 784>}, {pipeline_mode = #tpu.pipeline_mode<synchronous>, transform_indices = @transform_6, window_bounds = array<i64: 1, 784>}, {transform_indices = @transform_7, window_bounds = array<i64: 8, 784>}]} {
    %c0 = arith.constant 0 : index
    %c0_0 = arith.constant 0 : index
    %0 = vector.load %arg1[%c0, %c0_0] : memref<8x784xf32, #tpu.memory_space<vmem>>, vector<8x784xf32>
    %c0_1 = arith.constant 0 : index
    %c0_2 = arith.constant 0 : index
    %1 = vector.load %arg2[%c0_1, %c0_2] : memref<784x128xf32, #tpu.memory_space<vmem>>, vector<784x128xf32>
    %cst = arith.constant dense<0.000000e+00> : vector<8x128xf32>
    %2 = tpu.matmul %0, %1, %cst {dimension_numbers = #tpu.dot_dimension_numbers<[1], [0], [0], [1], [0, 0, 1, 1], [], []>} : vector<8x784xf32>, vector<784x128xf32>, vector<8x128xf32> -> vector<8x128xf32>
    %c0_3 = arith.constant 0 : index
    %c0_4 = arith.constant 0 : index
    %3 = vector.load %arg3[%c0_3, %c0_4] : memref<1x128xf32, #tpu.memory_space<vmem>>, vector<1x128xf32>
    %4 = vector.broadcast %3 : vector<1x128xf32> to vector<8x128xf32>
    %5 = arith.addf %2, %4 : vector<8x128xf32>
    %cst_5 = arith.constant 0.000000e+00 : f32
    %6 = vector.broadcast %cst_5 : f32 to vector<8x128xf32>
    %7 = arith.maximumf %5, %6 : vector<8x128xf32>
    %c0_6 = arith.constant 0 : index
    %c0_7 = arith.constant 0 : index
    %8 = vector.load %arg4[%c0_6, %c0_7] : memref<128x128xf32, #tpu.memory_space<vmem>>, vector<128x128xf32>
    %cst_8 = arith.constant dense<0.000000e+00> : vector<8x128xf32>
    %9 = tpu.matmul %7, %8, %cst_8 {dimension_numbers = #tpu.dot_dimension_numbers<[1], [0], [0], [1], [0, 0, 1, 1], [], []>} : vector<8x128xf32>, vector<128x128xf32>, vector<8x128xf32> -> vector<8x128xf32>
    %c0_9 = arith.constant 0 : index
    %c0_10 = arith.constant 0 : index
    %10 = vector.load %arg5[%c0_9, %c0_10] : memref<1x128xf32, #tpu.memory_space<vmem>>, vector<1x128xf32>
    %11 = vector.broadcast %10 : vector<1x128xf32> to vector<8x128xf32>
    %12 = arith.addf %9, %11 : vector<8x128xf32>
    %cst_11 = arith.constant 0.000000e+00 : f32
    %13 = vector.broadcast %cst_11 : f32 to vector<8x128xf32>
    %14 = arith.maximumf %12, %13 : vector<8x128xf32>
    %c0_12 = arith.constant 0 : index
    %c0_13 = arith.constant 0 : index
    %15 = vector.load %arg6[%c0_12, %c0_13] : memref<128x784xf32, #tpu.memory_space<vmem>>, vector<128x784xf32>
    %cst_14 = arith.constant dense<0.000000e+00> : vector<8x784xf32>
    %16 = tpu.matmul %14, %15, %cst_14 {dimension_numbers = #tpu.dot_dimension_numbers<[1], [0], [0], [1], [0, 0, 1, 1], [], []>} : vector<8x128xf32>, vector<128x784xf32>, vector<8x784xf32> -> vector<8x784xf32>
    %c0_15 = arith.constant 0 : index
    %c0_16 = arith.constant 0 : index
    %17 = vector.load %arg7[%c0_15, %c0_16] : memref<1x784xf32, #tpu.memory_space<vmem>>, vector<1x784xf32>
    %18 = vector.broadcast %17 : vector<1x784xf32> to vector<8x784xf32>
    %19 = arith.addf %16, %18 : vector<8x784xf32>
    %c0_17 = arith.constant 0 : index
    %c0_18 = arith.constant 0 : index
    %20 = vector.load %arg8[%c0_17, %c0_18] : memref<8x784xf32, #tpu.memory_space<vmem>>, vector<8x784xf32>
    tpu.vector_store %arg8[%c0_17, %c0_18], %19 {strides = array<i32>} : memref<8x784xf32, #tpu.memory_space<vmem>>, vector<8x784xf32>,
    return
  }
  func.func @transform_0(%arg0: i32) -> (i32, i32) {
    %c0_i32 = arith.constant 0 : i32
    %c0_i32_0 = arith.constant 0 : i32
    return %arg0, %c0_i32 : i32, i32
  }
  func.func @transform_1(%arg0: i32) -> (i32, i32) {
    %c0_i32 = arith.constant 0 : i32
    %c0_i32_0 = arith.constant 0 : i32
    %c0_i32_1 = arith.constant 0 : i32
    return %c0_i32, %c0_i32_0 : i32, i32
  }
  func.func @transform_2(%arg0: i32) -> (i32, i32) {
    %c0_i32 = arith.constant 0 : i32
    %c0_i32_0 = arith.constant 0 : i32
    %c0_i32_1 = arith.constant 0 : i32
    return %c0_i32, %c0_i32_0 : i32, i32
  }
  func.func @transform_3(%arg0: i32) -> (i32, i32) {
    %c0_i32 = arith.constant 0 : i32
    %c0_i32_0 = arith.constant 0 : i32
    %c0_i32_1 = arith.constant 0 : i32
    return %c0_i32, %c0_i32_0 : i32, i32
  }
  func.func @transform_4(%arg0: i32) -> (i32, i32) {
    %c0_i32 = arith.constant 0 : i32
    %c0_i32_0 = arith.constant 0 : i32
    %c0_i32_1 = arith.constant 0 : i32
    return %c0_i32, %c0_i32_0 : i32, i32
  }
  func.func @transform_5(%arg0: i32) -> (i32, i32) {
    %c0_i32 = arith.constant 0 : i32
    %c0_i32_0 = arith.constant 0 : i32
    %c0_i32_1 = arith.constant 0 : i32
    return %c0_i32, %c0_i32_0 : i32, i32
  }
  func.func @transform_6(%arg0: i32) -> (i32, i32) {
    %c0_i32 = arith.constant 0 : i32
    %c0_i32_0 = arith.constant 0 : i32
    %c0_i32_1 = arith.constant 0 : i32
    return %c0_i32, %c0_i32_0 : i32, i32
  }
  func.func @transform_7(%arg0: i32) -> (i32, i32) {
    %c0_i32 = arith.constant 0 : i32
    %c0_i32_0 = arith.constant 0 : i32
    return %arg0, %c0_i32 : i32, i32
  }
}

</mosaic_0001>

<llo_original>
// kernel: tpu_custom_call.1
$region0: #{tpu_custom_call.1}
  #allocation0 [shape = 'u32[]', space=smem, size = 0x4, offset = 0x4, fixed_abs, tag = 'smem constant byte address 0x4 - core index']
  #allocation1 [shape = 'u32[144,128]{1,0:T(1,128)}', space=vmem, size = 0x12000, scoped, tag = 'internal scratch']
  %s0 = inlined_call_operand.vmem [shape: f32[2,784], index: 0, kind: input, shape index: {}]
  %s1 = inlined_call_operand.vmem [shape: f32[784,128], index: 1, kind: input, shape index: {}]
  %s2 = inlined_call_operand.vmem [shape: f32[1,128], index: 2, kind: input, shape index: {}]
  %s3 = inlined_call_operand.vmem [shape: f32[128,128], index: 3, kind: input, shape index: {}]
  %s4 = inlined_call_operand.vmem [shape: f32[1,128], index: 4, kind: input, shape index: {}]
  %s5 = inlined_call_operand.vmem [shape: f32[128,784], index: 5, kind: input, shape index: {}]
  %s6 = inlined_call_operand.vmem [shape: f32[1,784], index: 6, kind: input, shape index: {}]
  %s7 = inlined_call_operand.hbm [shape: f32[2,784], index: 7, kind: output, shape index: {}]
  %s8 = sld [smem:[#allocation0]]
  $region38: #{tpu_custom_call.1} parent=0
    _
  %s10 = ssub.s32 1, %s8
  %s11 = scalar_select 0, %s10, %s8
  $region1: #{tpu_custom_call.1} parent=0
    #allocation2 [shape = 'u8[28672]{0}', space=vmem, size = 0x7000, scoped, tag = 'output window, operand 0, single buffered']
    #allocation3 [shape = 's32[1]{0}', space=sflag, size = 0x4, scoped, tag = 'scoped memory for tpu_custom_call.1']
    %12 = vsyncpa [#allocation3], 0
    // Predicated region
    $region2: #{tpu_custom_call.1} parent=1 // pred_check
      _
    $region3: #{tpu_custom_call.1} parent=1 // pred_check_branch
      %14 = sbr.rel (0) target = $region5
    $region4: #{tpu_custom_call.1} parent=1 // pred_region
      _
    $region5: #{tpu_custom_call.1} parent=1 // pred_fallthru
      _
    // Predicated region
    $region6: #{tpu_custom_call.1} parent=1 // pred_check
      _
    $region7: #{tpu_custom_call.1} parent=1 // pred_check_branch
      %16 = sbr.rel (0) target = $region9
    $region8: #{tpu_custom_call.1} parent=1 // pred_region
      _
    $region9: #{tpu_custom_call.1} parent=1 // pred_fallthru
      _
    // Predicated region
    $region10: #{tpu_custom_call.1} parent=1 // pred_check
      _
    $region11: #{tpu_custom_call.1} parent=1 // pred_check_branch
      %18 = sbr.rel (0) target = $region13
    $region12: #{tpu_custom_call.1} parent=1 // pred_region
      _
    $region13: #{tpu_custom_call.1} parent=1 // pred_fallthru
      _
    // Predicated region
    $region14: #{tpu_custom_call.1} parent=1 // pred_check
      _
    $region15: #{tpu_custom_call.1} parent=1 // pred_check_branch
      %20 = sbr.rel (0) target = $region17
    $region16: #{tpu_custom_call.1} parent=1 // pred_region
      _
    $region17: #{tpu_custom_call.1} parent=1 // pred_fallthru
      _
    // Predicated region
    $region18: #{tpu_custom_call.1} parent=1 // pred_check
      _
    $region19: #{tpu_custom_call.1} parent=1 // pred_check_branch
      %22 = sbr.rel (0) target = $region21
    $region20: #{tpu_custom_call.1} parent=1 // pred_region
      _
    $region21: #{tpu_custom_call.1} parent=1 // pred_fallthru
      _
    // Predicated region
    $region22: #{tpu_custom_call.1} parent=1 // pred_check
      _
    $region23: #{tpu_custom_call.1} parent=1 // pred_check_branch
      %24 = sbr.rel (0) target = $region25
    $region24: #{tpu_custom_call.1} parent=1 // pred_region
      _
    $region25: #{tpu_custom_call.1} parent=1 // pred_fallthru
      _
    // Predicated region
    $region26: #{tpu_custom_call.1} parent=1 // pred_check
      _
    $region27: #{tpu_custom_call.1} parent=1 // pred_check_branch
      %26 = sbr.rel (0) target = $region29
    $region28: #{tpu_custom_call.1} parent=1 // pred_region
      _
    $region29: #{tpu_custom_call.1} parent=1 // pred_fallthru
      _
    %v27 = vld [vmem:[%s0] sm:$0xff]
    %v28 = vld [vmem:[%s0 + $0x8] sm:$0x3f]
    %v29 = vld [vmem:[%s0 + $0xe] sm:$0xff]
    %v30 = vld [vmem:[%s0 + $0x16] sm:$0x3f]
    %v31 = vld [vmem:[%s0 + $0x1c] sm:$0xff]
    %v32 = vld [vmem:[%s0 + $0x24] sm:$0x3f]
    %v33 = vld [vmem:[%s0 + $0x2a] sm:$0xff]
    %v34 = vld [vmem:[%s0 + $0x32] sm:$0x3f]
    %v35 = vld [vmem:[%s1] sm:$0xff]
    %v36 = vld [vmem:[%s1 + $0x8] sm:$0xff]
    %v37 = vld [vmem:[%s1 + $0x10] sm:$0xff]
    %v38 = vld [vmem:[%s1 + $0x18] sm:$0xff]
    %v39 = vld [vmem:[%s1 + $0x20] sm:$0xff]
    %v40 = vld [vmem:[%s1 + $0x28] sm:$0xff]
    %v41 = vld [vmem:[%s1 + $0x30] sm:$0xff]
    %v42 = vld [vmem:[%s1 + $0x38] sm:$0xff]
    %v43 = vld [vmem:[%s1 + $0x40] sm:$0xff]
    %v44 = vld [vmem:[%s1 + $0x48] sm:$0xff]
    %v45 = vld [vmem:[%s1 + $0x50] sm:$0xff]
    %v46 = vld [vmem:[%s1 + $0x58] sm:$0xff]
    %v47 = vld [vmem:[%s1 + $0x60] sm:$0xff]
    %v48 = vld [vmem:[%s1 + $0x68] sm:$0xff]
    %v49 = vld [vmem:[%s1 + $0x70] sm:$0xff]
    %v50 = vld [vmem:[%s1 + $0x78] sm:$0xff]
    %v51 = vld [vmem:[%s1 + $0x80] sm:$0xff]
    %v52 = vld [vmem:[%s1 + $0x88] sm:$0xff]
    %v53 = vld [vmem:[%s1 + $0x90] sm:$0xff]
    %v54 = vld [vmem:[%s1 + $0x98] sm:$0xff]
    %v55 = vld [vmem:[%s1 + $0xa0] sm:$0xff]
    %v56 = vld [vmem:[%s1 + $0xa8] sm:$0xff]
    %v57 = vld [vmem:[%s1 + $0xb0] sm:$0xff]
    %v58 = vld [vmem:[%s1 + $0xb8] sm:$0xff]
    %v59 = vld [vmem:[%s1 + $0xc0] sm:$0xff]
    %v60 = vld [vmem:[%s1 + $0xc8] sm:$0xff]
    %v61 = vld [vmem:[%s1 + $0xd0] sm:$0xff]
    %v62 = vld [vmem:[%s1 + $0xd8] sm:$0xff]
    %v63 = vld [vmem:[%s1 + $0xe0] sm:$0xff]
    %v64 = vld [vmem:[%s1 + $0xe8] sm:$0xff]
    %v65 = vld [vmem:[%s1 + $0xf0] sm:$0xff]
    %v66 = vld [vmem:[%s1 + $0xf8] sm:$0xff]
    %v67 = vld [vmem:[%s1 + $0x100] sm:$0xff]
    %v68 = vld [vmem:[%s1 + $0x108] sm:$0xff]
    %v69 = vld [vmem:[%s1 + $0x110] sm:$0xff]
    %v70 = vld [vmem:[%s1 + $0x118] sm:$0xff]
    %v71 = vld [vmem:[%s1 + $0x120] sm:$0xff]
    %v72 = vld [vmem:[%s1 + $0x128] sm:$0xff]
    %v73 = vld [vmem:[%s1 + $0x130] sm:$0xff]
    %v74 = vld [vmem:[%s1 + $0x138] sm:$0xff]
    %v75 = vld [vmem:[%s1 + $0x140] sm:$0xff]
    %v76 = vld [vmem:[%s1 + $0x148] sm:$0xff]
    %v77 = vld [vmem:[%s1 + $0x150] sm:$0xff]
    %v78 = vld [vmem:[%s1 + $0x158] sm:$0xff]
    %v79 = vld [vmem:[%s1 + $0x160] sm:$0xff]
    %v80 = vld [vmem:[%s1 + $0x168] sm:$0xff]
    %v81 = vld [vmem:[%s1 + $0x170] sm:$0xff]
    %v82 = vld [vmem:[%s1 + $0x178] sm:$0xff]
    %v83 = vld [vmem:[%s1 + $0x180] sm:$0xff]
    %v84 = vld [vmem:[%s1 + $0x188] sm:$0xff]
    %v85 = vld [vmem:[%s1 + $0x190] sm:$0xff]
    %v86 = vld [vmem:[%s1 + $0x198] sm:$0xff]
    %v87 = vld [vmem:[%s1 + $0x1a0] sm:$0xff]
    %v88 = vld [vmem:[%s1 + $0x1a8] sm:$0xff]
    %v89 = vld [vmem:[%s1 + $0x1b0] sm:$0xff]
    %v90 = vld [vmem:[%s1 + $0x1b8] sm:$0xff]
    %v91 = vld [vmem:[%s1 + $0x1c0] sm:$0xff]
    %v92 = vld [vmem:[%s1 + $0x1c8] sm:$0xff]
    %v93 = vld [vmem:[%s1 + $0x1d0] sm:$0xff]
    %v94 = vld [vmem:[%s1 + $0x1d8] sm:$0xff]
    %v95 = vld [vmem:[%s1 + $0x1e0] sm:$0xff]
    %v96 = vld [vmem:[%s1 + $0x1e8] sm:$0xff]
    %v97 = vld [vmem:[%s1 + $0x1f0] sm:$0xff]
    %v98 = vld [vmem:[%s1 + $0x1f8] sm:$0xff]
    %v99 = vld [vmem:[%s1 + $0x200] sm:$0xff]
    %v100 = vld [vmem:[%s1 + $0x208] sm:$0xff]
    %v101 = vld [vmem:[%s1 + $0x210] sm:$0xff]
    %v102 = vld [vmem:[%s1 + $0x218] sm:$0xff]
    %v103 = vld [vmem:[%s1 + $0x220] sm:$0xff]
    %v104 = vld [vmem:[%s1 + $0x228] sm:$0xff]
    %v105 = vld [vmem:[%s1 + $0x230] sm:$0xff]
    %v106 = vld [vmem:[%s1 + $0x238] sm:$0xff]
    %v107 = vld [vmem:[%s1 + $0x240] sm:$0xff]
    %v108 = vld [vmem:[%s1 + $0x248] sm:$0xff]
    %v109 = vld [vmem:[%s1 + $0x250] sm:$0xff]
    %v110 = vld [vmem:[%s1 + $0x258] sm:$0xff]
    %v111 = vld [vmem:[%s1 + $0x260] sm:$0xff]
    %v112 = vld [vmem:[%s1 + $0x268] sm:$0xff]
    %v113 = vld [vmem:[%s1 + $0x270] sm:$0xff]
    %v114 = vld [vmem:[%s1 + $0x278] sm:$0xff]
    %v115 = vld [vmem:[%s1 + $0x280] sm:$0xff]
    %v116 = vld [vmem:[%s1 + $0x288] sm:$0xff]
    %v117 = vld [vmem:[%s1 + $0x290] sm:$0xff]
    %v118 = vld [vmem:[%s1 + $0x298] sm:$0xff]
    %v119 = vld [vmem:[%s1 + $0x2a0] sm:$0xff]
    %v120 = vld [vmem:[%s1 + $0x2a8] sm:$0xff]
    %v121 = vld [vmem:[%s1 + $0x2b0] sm:$0xff]
    %v122 = vld [vmem:[%s1 + $0x2b8] sm:$0xff]
    %v123 = vld [vmem:[%s1 + $0x2c0] sm:$0xff]
    %v124 = vld [vmem:[%s1 + $0x2c8] sm:$0xff]
    %v125 = vld [vmem:[%s1 + $0x2d0] sm:$0xff]
    %v126 = vld [vmem:[%s1 + $0x2d8] sm:$0xff]
    %v127 = vld [vmem:[%s1 + $0x2e0] sm:$0xff]
    %v128 = vld [vmem:[%s1 + $0x2e8] sm:$0xff]
    %v129 = vld [vmem:[%s1 + $0x2f0] sm:$0xff]
    %v130 = vld [vmem:[%s1 + $0x2f8] sm:$0xff]
    %v131 = vld [vmem:[%s1 + $0x300] sm:$0xff]
    %v132 = vld [vmem:[%s1 + $0x308] sm:$0xff]
    %v133 = vld [vmem:[%s2] sm:$0x1]
    %v135 = vlaneseq
    %v136 = vshrl.u32 %v135, 7
    %v137 = vsub.s32 0, %v136
    %v138 = vrot.slane %v133, %v137
    %v148 = vcombine.low %v27, %v29
    %v149 = vcombine.high %v27, %v29
    %v150 = vcombine.low %v31, %v33
    %v151 = vcombine.high %v31, %v33
    %v153 = vunpack.c.l.s4 1983009808
    %v154 = vunpack.c.0.s8 %v153
    %v155 = vlaneseq
    %v156 = vshrl.u32 %v155, 7
    %v157 = vsub.s32 %v154, %v156
    %v158 = vrot.slane %v148, %v157
    %v160 = vunpack.c.l.s4 1983009808
    %v161 = vunpack.c.0.s8 %v160
    %v162 = vlaneseq
    %v163 = vshrl.u32 %v162, 7
    %v164 = vsub.s32 %v161, %v163
    %v165 = vrot.slane %v149, %v164
    %v167 = vunpack.c.l.s4 1983009808
    %v168 = vunpack.c.0.s8 %v167
    %v169 = vlaneseq
    %v170 = vshrl.u32 %v169, 7
    %v171 = vsub.s32 %v168, %v170
    %v172 = vrot.slane %v150, %v171
    %v174 = vunpack.c.l.s4 1983009808
    %v175 = vunpack.c.0.s8 %v174
    %v176 = vlaneseq
    %v177 = vshrl.u32 %v176, 7
    %v178 = vsub.s32 %v175, %v177
    %v179 = vrot.slane %v151, %v178
    %v180 = vcombine.low %v158, %v172
    %v181 = vcombine.high %v158, %v172
    %v182 = vcombine.low %v165, %v179
    %v183 = vcombine.high %v165, %v179
    %v184 = vcombine.low %v28, %v30
    %v185 = vcombine.high %v28, %v30
    %v186 = vcombine.low %v32, %v34
    %v187 = vcombine.high %v32, %v34
    %v189 = vunpack.c.l.s4 1983009808
    %v190 = vunpack.c.0.s8 %v189
    %v191 = vlaneseq
    %v192 = vshrl.u32 %v191, 7
    %v193 = vsub.s32 %v190, %v192
    %v194 = vrot.slane %v184, %v193
    %v196 = vunpack.c.l.s4 1983009808
    %v197 = vunpack.c.0.s8 %v196
    %v198 = vlaneseq
    %v199 = vshrl.u32 %v198, 7
    %v200 = vsub.s32 %v197, %v199
    %v201 = vrot.slane %v185, %v200
    %v203 = vunpack.c.l.s4 1983009808
    %v204 = vunpack.c.0.s8 %v203
    %v205 = vlaneseq
    %v206 = vshrl.u32 %v205, 7
    %v207 = vsub.s32 %v204, %v206
    %v208 = vrot.slane %v186, %v207
    %v210 = vunpack.c.l.s4 1983009808
    %v211 = vunpack.c.0.s8 %v210
    %v212 = vlaneseq
    %v213 = vshrl.u32 %v212, 7
    %v214 = vsub.s32 %v211, %v213
    %v215 = vrot.slane %v187, %v214
    %v216 = vcombine.low %v194, %v208
    %v217 = vcombine.high %v194, %v208
    %v218 = vcombine.low %v201, %v215
    %vm225 = vcmask 130048
    %v226 = vsel %vm225, %v218, 0
    %228 = vmatprep.subr.mxu0 0.0
    %229 = vmatpush1.msra.mxu0 %v35
    %230 = vmatprep.subr.mxu0 0.0
    %231 = vmatpush1.msra.mxu0 %v36
    %232 = vmatprep.subr.mxu0 0.0
    %233 = vmatpush1.msra.mxu0 %v37
    %234 = vmatprep.subr.mxu0 0.0
    %235 = vmatpush1.msra.mxu0 %v38
    %236 = vmatprep.subr.mxu0 0.0
    %237 = vmatpush1.msra.mxu0 %v39
    %238 = vmatprep.subr.mxu0 0.0
    %239 = vmatpush1.msra.mxu0 %v40
    %240 = vmatprep.subr.mxu0 0.0
    %241 = vmatpush1.msra.mxu0 %v41
    %242 = vmatprep.subr.mxu0 0.0
    %243 = vmatpush1.msra.mxu0 %v42
    %244 = vmatprep.subr.mxu0 0.0
    %245 = vmatpush1.msra.mxu0 %v43
    %246 = vmatprep.subr.mxu0 0.0
    %247 = vmatpush1.msra.mxu0 %v44
    %248 = vmatprep.subr.mxu0 0.0
    %249 = vmatpush1.msra.mxu0 %v45
    %250 = vmatprep.subr.mxu0 0.0
    %251 = vmatpush1.msra.mxu0 %v46
    %252 = vmatprep.subr.mxu0 0.0
    %253 = vmatpush1.msra.mxu0 %v47
    %254 = vmatprep.subr.mxu0 0.0
    %255 = vmatpush1.msra.mxu0 %v48
    %256 = vmatprep.subr.mxu0 0.0
    %257 = vmatpush1.msra.mxu0 %v49
    %258 = vmatprep.subr.mxu0 0.0
    %259 = vmatpush1.msra.mxu0 %v50
    %260 = vmatprep.subr.mxu0 0.0
    %261 = vmatpush1.msra.mxu0 %v51
    %262 = vmatprep.subr.mxu0 0.0
    %263 = vmatpush1.msra.mxu0 %v52
    %264 = vmatprep.subr.mxu0 0.0
    %265 = vmatpush1.msra.mxu0 %v53
    %266 = vmatprep.subr.mxu0 0.0
    %267 = vmatpush1.msra.mxu0 %v54
    %268 = vmatprep.subr.mxu0 0.0
    %269 = vmatpush1.msra.mxu0 %v55
    %270 = vmatprep.subr.mxu0 0.0
    %271 = vmatpush1.msra.mxu0 %v56
    %272 = vmatprep.subr.mxu0 0.0
    %273 = vmatpush1.msra.mxu0 %v57
    %274 = vmatprep.subr.mxu0 0.0
    %275 = vmatpush1.msra.mxu0 %v58
    %276 = vmatprep.subr.mxu0 0.0
    %277 = vmatpush1.msra.mxu0 %v59
    %278 = vmatprep.subr.mxu0 0.0
    %279 = vmatpush1.msra.mxu0 %v60
    %280 = vmatprep.subr.mxu0 0.0
    %281 = vmatpush1.msra.mxu0 %v61
    %282 = vmatprep.subr.mxu0 0.0
    %283 = vmatpush1.msra.mxu0 %v62
    %284 = vmatprep.subr.mxu0 0.0
    %285 = vmatpush1.msra.mxu0 %v63
    %286 = vmatprep.subr.mxu0 0.0
    %287 = vmatpush1.msra.mxu0 %v64
    %288 = vmatprep.subr.mxu0 0.0
    %289 = vmatpush1.msra.mxu0 %v65
    %290 = vmatprep.subr.mxu0 0.0
    %291 = vmatpush1.msra.mxu0 %v66
    %292 = vmatprep.mubr.f32.mxu0 %v181
    %293 = vmatmul.mubr.f32.gmra.mrb[0].mxu0 %v180
    %v294 = vpop.f32.mrb[0].mxu0
    %v295 = vadd.f32 %v138, %v294
    %v296 = vpop.f32.mrb[0].mxu0
    %297 = vdwg.mxu0
    %298 = vmatprep.subr.mxu0 0.0
    %299 = vmatpush1.msra.mxu0 %v67
    %300 = vmatprep.subr.mxu0 0.0
    %301 = vmatpush1.msra.mxu0 %v68
    %302 = vmatprep.subr.mxu0 0.0
    %303 = vmatpush1.msra.mxu0 %v69
    %304 = vmatprep.subr.mxu0 0.0
    %305 = vmatpush1.msra.mxu0 %v70
    %306 = vmatprep.subr.mxu0 0.0
    %307 = vmatpush1.msra.mxu0 %v71
    %308 = vmatprep.subr.mxu0 0.0
    %309 = vmatpush1.msra.mxu0 %v72
    %310 = vmatprep.subr.mxu0 0.0
    %311 = vmatpush1.msra.mxu0 %v73
    %312 = vmatprep.subr.mxu0 0.0
    %313 = vmatpush1.msra.mxu0 %v74
    %314 = vmatprep.subr.mxu0 0.0
    %315 = vmatpush1.msra.mxu0 %v75
    %316 = vmatprep.subr.mxu0 0.0
    %317 = vmatpush1.msra.mxu0 %v76
    %318 = vmatprep.subr.mxu0 0.0
    %319 = vmatpush1.msra.mxu0 %v77
    %320 = vmatprep.subr.mxu0 0.0
    %321 = vmatpush1.msra.mxu0 %v78
    %322 = vmatprep.subr.mxu0 0.0
    %323 = vmatpush1.msra.mxu0 %v79
    %324 = vmatprep.subr.mxu0 0.0
    %325 = vmatpush1.msra.mxu0 %v80
    %326 = vmatprep.subr.mxu0 0.0
    %327 = vmatpush1.msra.mxu0 %v81
    %328 = vmatprep.subr.mxu0 0.0
    %329 = vmatpush1.msra.mxu0 %v82
    %330 = vmatprep.subr.mxu0 0.0
    %331 = vmatpush1.msra.mxu0 %v83
    %332 = vmatprep.subr.mxu0 0.0
    %333 = vmatpush1.msra.mxu0 %v84
    %334 = vmatprep.subr.mxu0 0.0
    %335 = vmatpush1.msra.mxu0 %v85
    %336 = vmatprep.subr.mxu0 0.0
    %337 = vmatpush1.msra.mxu0 %v86
    %338 = vmatprep.subr.mxu0 0.0
    %339 = vmatpush1.msra.mxu0 %v87
    %340 = vmatprep.subr.mxu0 0.0
    %341 = vmatpush1.msra.mxu0 %v88
    %342 = vmatprep.subr.mxu0 0.0
    %343 = vmatpush1.msra.mxu0 %v89
    %344 = vmatprep.subr.mxu0 0.0
    %345 = vmatpush1.msra.mxu0 %v90
    %346 = vmatprep.subr.mxu0 0.0
    %347 = vmatpush1.msra.mxu0 %v91
    %348 = vmatprep.subr.mxu0 0.0
    %349 = vmatpush1.msra.mxu0 %v92
    %350 = vmatprep.subr.mxu0 0.0
    %351 = vmatpush1.msra.mxu0 %v93
    %352 = vmatprep.subr.mxu0 0.0
    %353 = vmatpush1.msra.mxu0 %v94
    %354 = vmatprep.subr.mxu0 0.0
    %355 = vmatpush1.msra.mxu0 %v95
    %356 = vmatprep.subr.mxu0 0.0
    %357 = vmatpush1.msra.mxu0 %v96
    %358 = vmatprep.subr.mxu0 0.0
    %359 = vmatpush1.msra.mxu0 %v97
    %360 = vmatprep.subr.mxu0 0.0
    %361 = vmatpush1.msra.mxu0 %v98
    %362 = vmatprep.mubr.f32.mxu0 %v183
    %363 = vmatmul.mubr.f32.gmra.mrb[0].mxu0 %v182
    %v364 = vpop.f32.mrb[0].mxu0
    %v365 = vadd.f32 %v295, %v364
    %v366 = vpop.f32.mrb[0].mxu0
    %367 = vdwg.mxu0
    %368 = vmatprep.subr.mxu0 0.0
    %369 = vmatpush1.msra.mxu0 %v99
    %370 = vmatprep.subr.mxu0 0.0
    %371 = vmatpush1.msra.mxu0 %v100
    %372 = vmatprep.subr.mxu0 0.0
    %373 = vmatpush1.msra.mxu0 %v101
    %374 = vmatprep.subr.mxu0 0.0
    %375 = vmatpush1.msra.mxu0 %v102
    %376 = vmatprep.subr.mxu0 0.0
    %377 = vmatpush1.msra.mxu0 %v103
    %378 = vmatprep.subr.mxu0 0.0
    %379 = vmatpush1.msra.mxu0 %v104
    %380 = vmatprep.subr.mxu0 0.0
    %381 = vmatpush1.msra.mxu0 %v105
    %382 = vmatprep.subr.mxu0 0.0
    %383 = vmatpush1.msra.mxu0 %v106
    %384 = vmatprep.subr.mxu0 0.0
    %385 = vmatpush1.msra.mxu0 %v107
    %386 = vmatprep.subr.mxu0 0.0
    %387 = vmatpush1.msra.mxu0 %v108
    %388 = vmatprep.subr.mxu0 0.0
    %389 = vmatpush1.msra.mxu0 %v109
    %390 = vmatprep.subr.mxu0 0.0
    %391 = vmatpush1.msra.mxu0 %v110
    %392 = vmatprep.subr.mxu0 0.0
    %393 = vmatpush1.msra.mxu0 %v111
    %394 = vmatprep.subr.mxu0 0.0
    %395 = vmatpush1.msra.mxu0 %v112
    %396 = vmatprep.subr.mxu0 0.0
    %397 = vmatpush1.msra.mxu0 %v113
    %398 = vmatprep.subr.mxu0 0.0
    %399 = vmatpush1.msra.mxu0 %v114
    %400 = vmatprep.subr.mxu0 0.0
    %401 = vmatpush1.msra.mxu0 %v115
    %402 = vmatprep.subr.mxu0 0.0
    %403 = vmatpush1.msra.mxu0 %v116
    %404 = vmatprep.subr.mxu0 0.0
    %405 = vmatpush1.msra.mxu0 %v117
    %406 = vmatprep.subr.mxu0 0.0
    %407 = vmatpush1.msra.mxu0 %v118
    %408 = vmatprep.subr.mxu0 0.0
    %409 = vmatpush1.msra.mxu0 %v119
    %410 = vmatprep.subr.mxu0 0.0
    %411 = vmatpush1.msra.mxu0 %v120
    %412 = vmatprep.subr.mxu0 0.0
    %413 = vmatpush1.msra.mxu0 %v121
    %414 = vmatprep.subr.mxu0 0.0
    %415 = vmatpush1.msra.mxu0 %v122
    %416 = vmatprep.subr.mxu0 0.0
    %417 = vmatpush1.msra.mxu0 %v123
    %418 = vmatprep.subr.mxu0 0.0
    %419 = vmatpush1.msra.mxu0 %v124
    %420 = vmatprep.subr.mxu0 0.0
    %421 = vmatpush1.msra.mxu0 %v125
    %422 = vmatprep.subr.mxu0 0.0
    %423 = vmatpush1.msra.mxu0 %v126
    %424 = vmatprep.subr.mxu0 0.0
    %425 = vmatpush1.msra.mxu0 %v127
    %426 = vmatprep.subr.mxu0 0.0
    %427 = vmatpush1.msra.mxu0 %v128
    %428 = vmatprep.subr.mxu0 0.0
    %429 = vmatpush1.msra.mxu0 %v129
    %430 = vmatprep.subr.mxu0 0.0
    %431 = vmatpush1.msra.mxu0 %v130
    %432 = vmatprep.mubr.f32.mxu0 %v217
    %433 = vmatmul.mubr.f32.gmra.mrb[0].mxu0 %v216
    %v434 = vpop.f32.mrb[0].mxu0
    %v435 = vadd.f32 %v365, %v434
    %v436 = vpop.f32.mrb[0].mxu0
    %437 = vdwg.mxu0
    %438 = vmatprep.subr.mxu0 0.0
    %439 = vmatpush1.msra.mxu0 %v131
    %440 = vmatprep.subr.mxu0 0.0
    %441 = vmatpush1.msra.mxu0 %v132
    %442 = vmatprep.subr.mxu0 0.0
    %443 = vmatpush1.msra.mxu0 0.0
    %444 = vmatprep.subr.mxu0 0.0
    %445 = vmatpush1.msra.mxu0 0.0
    %446 = vmatprep.subr.mxu0 0.0
    %447 = vmatpush1.msra.mxu0 0.0
    %448 = vmatprep.subr.mxu0 0.0
    %449 = vmatpush1.msra.mxu0 0.0
    %450 = vmatprep.subr.mxu0 0.0
    %451 = vmatpush1.msra.mxu0 0.0
    %452 = vmatprep.subr.mxu0 0.0
    %453 = vmatpush1.msra.mxu0 0.0
    %454 = vmatprep.subr.mxu0 0.0
    %455 = vmatpush1.msra.mxu0 0.0
    %456 = vmatprep.subr.mxu0 0.0
    %457 = vmatpush1.msra.mxu0 0.0
    %458 = vmatprep.subr.mxu0 0.0
    %459 = vmatpush1.msra.mxu0 0.0
    %460 = vmatprep.subr.mxu0 0.0
    %461 = vmatpush1.msra.mxu0 0.0
    %462 = vmatprep.subr.mxu0 0.0
    %463 = vmatpush1.msra.mxu0 0.0
    %464 = vmatprep.subr.mxu0 0.0
    %465 = vmatpush1.msra.mxu0 0.0
    %466 = vmatprep.subr.mxu0 0.0
    %467 = vmatpush1.msra.mxu0 0.0
    %468 = vmatprep.subr.mxu0 0.0
    %469 = vmatpush1.msra.mxu0 0.0
    %470 = vmatprep.subr.mxu0 0.0
    %471 = vmatpush1.msra.mxu0 0.0
    %472 = vmatprep.subr.mxu0 0.0
    %473 = vmatpush1.msra.mxu0 0.0
    %474 = vmatprep.subr.mxu0 0.0
    %475 = vmatpush1.msra.mxu0 0.0
    %476 = vmatprep.subr.mxu0 0.0
    %477 = vmatpush1.msra.mxu0 0.0
    %478 = vmatprep.subr.mxu0 0.0
    %479 = vmatpush1.msra.mxu0 0.0
    %480 = vmatprep.subr.mxu0 0.0
    %481 = vmatpush1.msra.mxu0 0.0
    %482 = vmatprep.subr.mxu0 0.0
    %483 = vmatpush1.msra.mxu0 0.0
    %484 = vmatprep.subr.mxu0 0.0
    %485 = vmatpush1.msra.mxu0 0.0
    %486 = vmatprep.subr.mxu0 0.0
    %487 = vmatpush1.msra.mxu0 0.0
    %488 = vmatprep.subr.mxu0 0.0
    %489 = vmatpush1.msra.mxu0 0.0
    %490 = vmatprep.subr.mxu0 0.0
    %491 = vmatpush1.msra.mxu0 0.0
    %492 = vmatprep.subr.mxu0 0.0
    %493 = vmatpush1.msra.mxu0 0.0
    %494 = vmatprep.subr.mxu0 0.0
    %495 = vmatpush1.msra.mxu0 0.0
    %496 = vmatprep.subr.mxu0 0.0
    %497 = vmatpush1.msra.mxu0 0.0
    %498 = vmatprep.subr.mxu0 0.0
    %499 = vmatpush1.msra.mxu0 0.0
    %500 = vmatprep.subr.mxu0 0.0
    %501 = vmatpush1.msra.mxu0 0.0
    %502 = vmatprep.mubr.f32.mxu0 0.0
    %503 = vmatmul.mubr.f32.gmra.mrb[0].mxu0 %v226
    %v504 = vpop.f32.mrb[0].mxu0
    %v505 = vadd.f32 %v435, %v504
    %v506 = vpop.f32.mrb[0].mxu0
    %507 = vdwg.mxu0
    %v508 = vmax.f32 %v505, 0.0
    %v509 = vld [vmem:[%s3] sm:$0xff]
    %v510 = vld [vmem:[%s3 + $0x8] sm:$0xff]
    %v511 = vld [vmem:[%s3 + $0x10] sm:$0xff]
    %v512 = vld [vmem:[%s3 + $0x18] sm:$0xff]
    %v513 = vld [vmem:[%s3 + $0x20] sm:$0xff]
    %v514 = vld [vmem:[%s3 + $0x28] sm:$0xff]
    %v515 = vld [vmem:[%s3 + $0x30] sm:$0xff]
    %v516 = vld [vmem:[%s3 + $0x38] sm:$0xff]
    %v517 = vld [vmem:[%s3 + $0x40] sm:$0xff]
    %v518 = vld [vmem:[%s3 + $0x48] sm:$0xff]
    %v519 = vld [vmem:[%s3 + $0x50] sm:$0xff]
    %v520 = vld [vmem:[%s3 + $0x58] sm:$0xff]
    %v521 = vld [vmem:[%s3 + $0x60] sm:$0xff]
    %v522 = vld [vmem:[%s3 + $0x68] sm:$0xff]
    %v523 = vld [vmem:[%s3 + $0x70] sm:$0xff]
    %v524 = vld [vmem:[%s3 + $0x78] sm:$0xff]
    %v525 = vld [vmem:[%s4] sm:$0x1]
    %v527 = vlaneseq
    %v528 = vshrl.u32 %v527, 7
    %v529 = vsub.s32 0, %v528
    %v530 = vrot.slane %v525, %v529
    %532 = vmatprep.subr.mxu0 0.0
    %533 = vmatpush1.msra.mxu0 %v509
    %534 = vmatprep.subr.mxu0 0.0
    %535 = vmatpush1.msra.mxu0 %v510
    %536 = vmatprep.subr.mxu0 0.0
    %537 = vmatpush1.msra.mxu0 %v511
    %538 = vmatprep.subr.mxu0 0.0
    %539 = vmatpush1.msra.mxu0 %v512
    %540 = vmatprep.subr.mxu0 0.0
    %541 = vmatpush1.msra.mxu0 %v513
    %542 = vmatprep.subr.mxu0 0.0
    %543 = vmatpush1.msra.mxu0 %v514
    %544 = vmatprep.subr.mxu0 0.0
    %545 = vmatpush1.msra.mxu0 %v515
    %546 = vmatprep.subr.mxu0 0.0
    %547 = vmatpush1.msra.mxu0 %v516
    %548 = vmatprep.subr.mxu0 0.0
    %549 = vmatpush1.msra.mxu0 %v517
    %550 = vmatprep.subr.mxu0 0.0
    %551 = vmatpush1.msra.mxu0 %v518
    %552 = vmatprep.subr.mxu0 0.0
    %553 = vmatpush1.msra.mxu0 %v519
    %554 = vmatprep.subr.mxu0 0.0
    %555 = vmatpush1.msra.mxu0 %v520
    %556 = vmatprep.subr.mxu0 0.0
    %557 = vmatpush1.msra.mxu0 %v521
    %558 = vmatprep.subr.mxu0 0.0
    %559 = vmatpush1.msra.mxu0 %v522
    %560 = vmatprep.subr.mxu0 0.0
    %561 = vmatpush1.msra.mxu0 %v523
    %562 = vmatprep.subr.mxu0 0.0
    %563 = vmatpush1.msra.mxu0 %v524
    %564 = vmatprep.subr.mxu0 0.0
    %565 = vmatpush1.msra.mxu0 0.0
    %566 = vmatprep.subr.mxu0 0.0
    %567 = vmatpush1.msra.mxu0 0.0
    %568 = vmatprep.subr.mxu0 0.0
    %569 = vmatpush1.msra.mxu0 0.0
    %570 = vmatprep.subr.mxu0 0.0
    %571 = vmatpush1.msra.mxu0 0.0
    %572 = vmatprep.subr.mxu0 0.0
    %573 = vmatpush1.msra.mxu0 0.0
    %574 = vmatprep.subr.mxu0 0.0
    %575 = vmatpush1.msra.mxu0 0.0
    %576 = vmatprep.subr.mxu0 0.0
    %577 = vmatpush1.msra.mxu0 0.0
    %578 = vmatprep.subr.mxu0 0.0
    %579 = vmatpush1.msra.mxu0 0.0
    %580 = vmatprep.subr.mxu0 0.0
    %581 = vmatpush1.msra.mxu0 0.0
    %582 = vmatprep.subr.mxu0 0.0
    %583 = vmatpush1.msra.mxu0 0.0
    %584 = vmatprep.subr.mxu0 0.0
    %585 = vmatpush1.msra.mxu0 0.0
    %586 = vmatprep.subr.mxu0 0.0
    %587 = vmatpush1.msra.mxu0 0.0
    %588 = vmatprep.subr.mxu0 0.0
    %589 = vmatpush1.msra.mxu0 0.0
    %590 = vmatprep.subr.mxu0 0.0
    %591 = vmatpush1.msra.mxu0 0.0
    %592 = vmatprep.subr.mxu0 0.0
    %593 = vmatpush1.msra.mxu0 0.0
    %594 = vmatprep.subr.mxu0 0.0
    %595 = vmatpush1.msra.mxu0 0.0
    %596 = vmatprep.mubr.f32.mxu0 0.0
    %597 = vmatmul.mubr.f32.gmra.mrb[0].mxu0 %v508
    %v598 = vpop.f32.mrb[0].mxu0
    %v599 = vadd.f32 %v530, %v598
    %v600 = vpop.f32.mrb[0].mxu0
    %601 = vdwg.mxu0
    %v602 = vmax.f32 %v599, 0.0
    %v603 = vld [vmem:[%s5] sm:$0xff]
    %v604 = vld [vmem:[%s5 + $0x8] sm:$0xff]
    %v605 = vld [vmem:[%s5 + $0x10] sm:$0xff]
    %v606 = vld [vmem:[%s5 + $0x18] sm:$0xff]
    %v607 = vld [vmem:[%s5 + $0x20] sm:$0xff]
    %v608 = vld [vmem:[%s5 + $0x28] sm:$0xff]
    %v609 = vld [vmem:[%s5 + $0x30] sm:$0xff]
    %v610 = vld [vmem:[%s5 + $0x38] sm:$0xff]
    %v611 = vld [vmem:[%s5 + $0x40] sm:$0xff]
    %v612 = vld [vmem:[%s5 + $0x48] sm:$0xff]
    %v613 = vld [vmem:[%s5 + $0x50] sm:$0xff]
    %v614 = vld [vmem:[%s5 + $0x58] sm:$0xff]
    %v615 = vld [vmem:[%s5 + $0x60] sm:$0xff]
    %v616 = vld [vmem:[%s5 + $0x68] sm:$0xff]
    %v617 = vld [vmem:[%s5 + $0x70] sm:$0xff]
    %v618 = vld [vmem:[%s5 + $0x78] sm:$0xff]
    %v619 = vld [vmem:[%s5 + $0x80] sm:$0xff]
    %v620 = vld [vmem:[%s5 + $0x88] sm:$0xff]
    %v621 = vld [vmem:[%s5 + $0x90] sm:$0xff]
    %v622 = vld [vmem:[%s5 + $0x98] sm:$0xff]
    %v623 = vld [vmem:[%s5 + $0xa0] sm:$0xff]
    %v624 = vld [vmem:[%s5 + $0xa8] sm:$0xff]
    %v625 = vld [vmem:[%s5 + $0xb0] sm:$0xff]
    %v626 = vld [vmem:[%s5 + $0xb8] sm:$0xff]
    %v627 = vld [vmem:[%s5 + $0xc0] sm:$0xff]
    %v628 = vld [vmem:[%s5 + $0xc8] sm:$0xff]
    %v629 = vld [vmem:[%s5 + $0xd0] sm:$0xff]
    %v630 = vld [vmem:[%s5 + $0xd8] sm:$0xff]
    %v631 = vld [vmem:[%s5 + $0xe0] sm:$0xff]
    %v632 = vld [vmem:[%s5 + $0xe8] sm:$0xff]
    %v633 = vld [vmem:[%s5 + $0xf0] sm:$0xff]
    %v634 = vld [vmem:[%s5 + $0xf8] sm:$0xff]
    %v635 = vld [vmem:[%s5 + $0x100] sm:$0xff]
    %v636 = vld [vmem:[%s5 + $0x108] sm:$0xff]
    %v637 = vld [vmem:[%s5 + $0x110] sm:$0xff]
    %v638 = vld [vmem:[%s5 + $0x118] sm:$0xff]
    %v639 = vld [vmem:[%s5 + $0x120] sm:$0xff]
    %v640 = vld [vmem:[%s5 + $0x128] sm:$0xff]
    %v641 = vld [vmem:[%s5 + $0x130] sm:$0xff]
    %v642 = vld [vmem:[%s5 + $0x138] sm:$0xff]
    %v643 = vld [vmem:[%s5 + $0x140] sm:$0xff]
    %v644 = vld [vmem:[%s5 + $0x148] sm:$0xff]
    %v645 = vld [vmem:[%s5 + $0x150] sm:$0xff]
    %v646 = vld [vmem:[%s5 + $0x158] sm:$0xff]
    %v647 = vld [vmem:[%s5 + $0x160] sm:$0xff]
    %v648 = vld [vmem:[%s5 + $0x168] sm:$0xff]
    %v649 = vld [vmem:[%s5 + $0x170] sm:$0xff]
    %v650 = vld [vmem:[%s5 + $0x178] sm:$0xff]
    %v651 = vld [vmem:[%s5 + $0x180] sm:$0xff]
    %v652 = vld [vmem:[%s5 + $0x188] sm:$0xff]
    %v653 = vld [vmem:[%s5 + $0x190] sm:$0xff]
    %v654 = vld [vmem:[%s5 + $0x198] sm:$0xff]
    %v655 = vld [vmem:[%s5 + $0x1a0] sm:$0xff]
    %v656 = vld [vmem:[%s5 + $0x1a8] sm:$0xff]
    %v657 = vld [vmem:[%s5 + $0x1b0] sm:$0xff]
    %v658 = vld [vmem:[%s5 + $0x1b8] sm:$0xff]
    %v659 = vld [vmem:[%s5 + $0x1c0] sm:$0xff]
    %v660 = vld [vmem:[%s5 + $0x1c8] sm:$0xff]
    %v661 = vld [vmem:[%s5 + $0x1d0] sm:$0xff]
    %v662 = vld [vmem:[%s5 + $0x1d8] sm:$0xff]
    %v663 = vld [vmem:[%s5 + $0x1e0] sm:$0xff]
    %v664 = vld [vmem:[%s5 + $0x1e8] sm:$0xff]
    %v665 = vld [vmem:[%s5 + $0x1f0] sm:$0xff]
    %v666 = vld [vmem:[%s5 + $0x1f8] sm:$0xff]
    %v667 = vld [vmem:[%s5 + $0x200] sm:$0xff]
    %v668 = vld [vmem:[%s5 + $0x208] sm:$0xff]
    %v669 = vld [vmem:[%s5 + $0x210] sm:$0xff]
    %v670 = vld [vmem:[%s5 + $0x218] sm:$0xff]
    %v671 = vld [vmem:[%s5 + $0x220] sm:$0xff]
    %v672 = vld [vmem:[%s5 + $0x228] sm:$0xff]
    %v673 = vld [vmem:[%s5 + $0x230] sm:$0xff]
    %v674 = vld [vmem:[%s5 + $0x238] sm:$0xff]
    %v675 = vld [vmem:[%s5 + $0x240] sm:$0xff]
    %v676 = vld [vmem:[%s5 + $0x248] sm:$0xff]
    %v677 = vld [vmem:[%s5 + $0x250] sm:$0xff]
    %v678 = vld [vmem:[%s5 + $0x258] sm:$0xff]
    %v679 = vld [vmem:[%s5 + $0x260] sm:$0xff]
    %v680 = vld [vmem:[%s5 + $0x268] sm:$0xff]
    %v681 = vld [vmem:[%s5 + $0x270] sm:$0xff]
    %v682 = vld [vmem:[%s5 + $0x278] sm:$0xff]
    %v683 = vld [vmem:[%s5 + $0x280] sm:$0xff]
    %v684 = vld [vmem:[%s5 + $0x288] sm:$0xff]
    %v685 = vld [vmem:[%s5 + $0x290] sm:$0xff]
    %v686 = vld [vmem:[%s5 + $0x298] sm:$0xff]
    %v687 = vld [vmem:[%s5 + $0x2a0] sm:$0xff]
    %v688 = vld [vmem:[%s5 + $0x2a8] sm:$0xff]
    %v689 = vld [vmem:[%s5 + $0x2b0] sm:$0xff]
    %v690 = vld [vmem:[%s5 + $0x2b8] sm:$0xff]
    %v691 = vld [vmem:[%s5 + $0x2c0] sm:$0xff]
    %v692 = vld [vmem:[%s5 + $0x2c8] sm:$0xff]
    %v693 = vld [vmem:[%s5 + $0x2d0] sm:$0xff]
    %v694 = vld [vmem:[%s5 + $0x2d8] sm:$0xff]
    %v695 = vld [vmem:[%s5 + $0x2e0] sm:$0xff]
    %v696 = vld [vmem:[%s5 + $0x2e8] sm:$0xff]
    %v697 = vld [vmem:[%s5 + $0x2f0] sm:$0xff]
    %v698 = vld [vmem:[%s5 + $0x2f8] sm:$0xff]
    %v699 = vld [vmem:[%s5 + $0x300] sm:$0xff]
    %v700 = vld [vmem:[%s5 + $0x308] sm:$0xff]
    %v701 = vld [vmem:[%s5 + $0x310] sm:$0xff]
    %v702 = vld [vmem:[%s5 + $0x318] sm:$0xff]
    %v703 = vld [vmem:[%s5 + $0x320] sm:$0xff]
    %v704 = vld [vmem:[%s5 + $0x328] sm:$0xff]
    %v705 = vld [vmem:[%s5 + $0x330] sm:$0xff]
    %v706 = vld [vmem:[%s5 + $0x338] sm:$0xff]
    %v707 = vld [vmem:[%s5 + $0x340] sm:$0xff]
    %v708 = vld [vmem:[%s5 + $0x348] sm:$0xff]
    %v709 = vld [vmem:[%s5 + $0x350] sm:$0xff]
    %v710 = vld [vmem:[%s5 + $0x358] sm:$0xff]
    %v711 = vld [vmem:[%s5 + $0x360] sm:$0xff]
    %v712 = vld [vmem:[%s5 + $0x368] sm:$0xff]
    %v713 = vld [vmem:[%s5 + $0x370] sm:$0xff]
    %v714 = vld [vmem:[%s5 + $0x378] sm:$0xff]
    %v715 = vld [vmem:[%s6] sm:$0x7f]
    %v717 = vlaneseq
    %v718 = vshrl.u32 %v717, 7
    %v719 = vsub.s32 0, %v718
    %v720 = vrot.slane %v715, %v719
    %v721 = vlaneseq
    %v722 = vshrl.u32 %v721, 7
    %v723 = vsub.s32 1, %v722
    %v724 = vrot.slane %v715, %v723
    %v725 = vlaneseq
    %v726 = vshrl.u32 %v725, 7
    %v727 = vsub.s32 2, %v726
    %v728 = vrot.slane %v715, %v727
    %v729 = vlaneseq
    %v730 = vshrl.u32 %v729, 7
    %v731 = vsub.s32 3, %v730
    %v732 = vrot.slane %v715, %v731
    %v733 = vlaneseq
    %v734 = vshrl.u32 %v733, 7
    %v735 = vsub.s32 4, %v734
    %v736 = vrot.slane %v715, %v735
    %v737 = vlaneseq
    %v738 = vshrl.u32 %v737, 7
    %v739 = vsub.s32 5, %v738
    %v740 = vrot.slane %v715, %v739
    %v741 = vlaneseq
    %v742 = vshrl.u32 %v741, 7
    %v743 = vsub.s32 6, %v742
    %v744 = vrot.slane %v715, %v743
    %752 = vmatprep.subr.mxu0 %v604
    %753 = vmatpush1.msra.mxu0 %v603
    %754 = vmatprep.subr.mxu0 %v611
    %755 = vmatpush1.msra.mxu0 %v610
    %756 = vmatprep.subr.mxu0 %v618
    %757 = vmatpush1.msra.mxu0 %v617
    %758 = vmatprep.subr.mxu0 %v625
    %759 = vmatpush1.msra.mxu0 %v624
    %760 = vmatprep.subr.mxu0 %v632
    %761 = vmatpush1.msra.mxu0 %v631
    %762 = vmatprep.subr.mxu0 %v639
    %763 = vmatpush1.msra.mxu0 %v638
    %764 = vmatprep.subr.mxu0 %v646
    %765 = vmatpush1.msra.mxu0 %v645
    %766 = vmatprep.subr.mxu0 %v653
    %767 = vmatpush1.msra.mxu0 %v652
    %768 = vmatprep.subr.mxu0 %v660
    %769 = vmatpush1.msra.mxu0 %v659
    %770 = vmatprep.subr.mxu0 %v667
    %771 = vmatpush1.msra.mxu0 %v666
    %772 = vmatprep.subr.mxu0 %v674
    %773 = vmatpush1.msra.mxu0 %v673
    %774 = vmatprep.subr.mxu0 %v681
    %775 = vmatpush1.msra.mxu0 %v680
    %776 = vmatprep.subr.mxu0 %v688
    %777 = vmatpush1.msra.mxu0 %v687
    %778 = vmatprep.subr.mxu0 %v695
    %779 = vmatpush1.msra.mxu0 %v694
    %780 = vmatprep.subr.mxu0 %v702
    %781 = vmatpush1.msra.mxu0 %v701
    %782 = vmatprep.subr.mxu0 %v709
    %783 = vmatpush1.msra.mxu0 %v708
    %784 = vmatprep.subr.mxu0 0.0
    %785 = vmatpush1.msra.mxu0 0.0
    %786 = vmatprep.subr.mxu0 0.0
    %787 = vmatpush1.msra.mxu0 0.0
    %788 = vmatprep.subr.mxu0 0.0
    %789 = vmatpush1.msra.mxu0 0.0
    %790 = vmatprep.subr.mxu0 0.0
    %791 = vmatpush1.msra.mxu0 0.0
    %792 = vmatprep.subr.mxu0 0.0
    %793 = vmatpush1.msra.mxu0 0.0
    %794 = vmatprep.subr.mxu0 0.0
    %795 = vmatpush1.msra.mxu0 0.0
    %796 = vmatprep.subr.mxu0 0.0
    %797 = vmatpush1.msra.mxu0 0.0
    %798 = vmatprep.subr.mxu0 0.0
    %799 = vmatpush1.msra.mxu0 0.0
    %800 = vmatprep.subr.mxu0 0.0
    %801 = vmatpush1.msra.mxu0 0.0
    %802 = vmatprep.subr.mxu0 0.0
    %803 = vmatpush1.msra.mxu0 0.0
    %804 = vmatprep.subr.mxu0 0.0
    %805 = vmatpush1.msra.mxu0 0.0
    %806 = vmatprep.subr.mxu0 0.0
    %807 = vmatpush1.msra.mxu0 0.0
    %808 = vmatprep.subr.mxu0 0.0
    %809 = vmatpush1.msra.mxu0 0.0
    %810 = vmatprep.subr.mxu0 0.0
    %811 = vmatpush1.msra.mxu0 0.0
    %812 = vmatprep.subr.mxu0 0.0
    %813 = vmatpush1.msra.mxu0 0.0
    %814 = vmatprep.subr.mxu0 0.0
    %815 = vmatpush1.msra.mxu0 0.0
    %816 = vmatprep.mubr.f32.mxu0 0.0
    %817 = vmatmul.mubr.f32.gmra.mrb[0].mxu0 %v602
    %v818 = vpop.f32.mrb[0].mxu0
    %v819 = vadd.f32 %v720, %v818
    %v820 = vpop.f32.mrb[0].mxu0
    %v821 = vadd.f32 %v724, %v820
    %822 = vdwg.mxu0
    %823 = vmatprep.subr.mxu0 %v606
    %824 = vmatpush1.msra.mxu0 %v605
    %825 = vmatprep.subr.mxu0 %v613
    %826 = vmatpush1.msra.mxu0 %v612
    %827 = vmatprep.subr.mxu0 %v620
    %828 = vmatpush1.msra.mxu0 %v619
    %829 = vmatprep.subr.mxu0 %v627
    %830 = vmatpush1.msra.mxu0 %v626
    %831 = vmatprep.subr.mxu0 %v634
    %832 = vmatpush1.msra.mxu0 %v633
    %833 = vmatprep.subr.mxu0 %v641
    %834 = vmatpush1.msra.mxu0 %v640
    %835 = vmatprep.subr.mxu0 %v648
    %836 = vmatpush1.msra.mxu0 %v647
    %837 = vmatprep.subr.mxu0 %v655
    %838 = vmatpush1.msra.mxu0 %v654
    %839 = vmatprep.subr.mxu0 %v662
    %840 = vmatpush1.msra.mxu0 %v661
    %841 = vmatprep.subr.mxu0 %v669
    %842 = vmatpush1.msra.mxu0 %v668
    %843 = vmatprep.subr.mxu0 %v676
    %844 = vmatpush1.msra.mxu0 %v675
    %845 = vmatprep.subr.mxu0 %v683
    %846 = vmatpush1.msra.mxu0 %v682
    %847 = vmatprep.subr.mxu0 %v690
    %848 = vmatpush1.msra.mxu0 %v689
    %849 = vmatprep.subr.mxu0 %v697
    %850 = vmatpush1.msra.mxu0 %v696
    %851 = vmatprep.subr.mxu0 %v704
    %852 = vmatpush1.msra.mxu0 %v703
    %853 = vmatprep.subr.mxu0 %v711
    %854 = vmatpush1.msra.mxu0 %v710
    %855 = vmatprep.subr.mxu0 0.0
    %856 = vmatpush1.msra.mxu0 0.0
    %857 = vmatprep.subr.mxu0 0.0
    %858 = vmatpush1.msra.mxu0 0.0
    %859 = vmatprep.subr.mxu0 0.0
    %860 = vmatpush1.msra.mxu0 0.0
    %861 = vmatprep.subr.mxu0 0.0
    %862 = vmatpush1.msra.mxu0 0.0
    %863 = vmatprep.subr.mxu0 0.0
    %864 = vmatpush1.msra.mxu0 0.0
    %865 = vmatprep.subr.mxu0 0.0
    %866 = vmatpush1.msra.mxu0 0.0
    %867 = vmatprep.subr.mxu0 0.0
    %868 = vmatpush1.msra.mxu0 0.0
    %869 = vmatprep.subr.mxu0 0.0
    %870 = vmatpush1.msra.mxu0 0.0
    %871 = vmatprep.subr.mxu0 0.0
    %872 = vmatpush1.msra.mxu0 0.0
    %873 = vmatprep.subr.mxu0 0.0
    %874 = vmatpush1.msra.mxu0 0.0
    %875 = vmatprep.subr.mxu0 0.0
    %876 = vmatpush1.msra.mxu0 0.0
    %877 = vmatprep.subr.mxu0 0.0
    %878 = vmatpush1.msra.mxu0 0.0
    %879 = vmatprep.subr.mxu0 0.0
    %880 = vmatpush1.msra.mxu0 0.0
    %881 = vmatprep.subr.mxu0 0.0
    %882 = vmatpush1.msra.mxu0 0.0
    %883 = vmatprep.subr.mxu0 0.0
    %884 = vmatpush1.msra.mxu0 0.0
    %885 = vmatprep.subr.mxu0 0.0
    %886 = vmatpush1.msra.mxu0 0.0
    %887 = vmatprep.mubr.f32.mxu0 0.0
    %888 = vmatmul.mubr.f32.gmra.mrb[0].mxu0 %v602
    %v889 = vpop.f32.mrb[0].mxu0
    %v890 = vadd.f32 %v728, %v889
    %v891 = vpop.f32.mrb[0].mxu0
    %v892 = vadd.f32 %v732, %v891
    %893 = vdwg.mxu0
    %894 = vmatprep.subr.mxu0 %v608
    %895 = vmatpush1.msra.mxu0 %v607
    %896 = vmatprep.subr.mxu0 %v615
    %897 = vmatpush1.msra.mxu0 %v614
    %898 = vmatprep.subr.mxu0 %v622
    %899 = vmatpush1.msra.mxu0 %v621
    %900 = vmatprep.subr.mxu0 %v629
    %901 = vmatpush1.msra.mxu0 %v628
    %902 = vmatprep.subr.mxu0 %v636
    %903 = vmatpush1.msra.mxu0 %v635
    %904 = vmatprep.subr.mxu0 %v643
    %905 = vmatpush1.msra.mxu0 %v642
    %906 = vmatprep.subr.mxu0 %v650
    %907 = vmatpush1.msra.mxu0 %v649
    %908 = vmatprep.subr.mxu0 %v657
    %909 = vmatpush1.msra.mxu0 %v656
    %910 = vmatprep.subr.mxu0 %v664
    %911 = vmatpush1.msra.mxu0 %v663
    %912 = vmatprep.subr.mxu0 %v671
    %913 = vmatpush1.msra.mxu0 %v670
    %914 = vmatprep.subr.mxu0 %v678
    %915 = vmatpush1.msra.mxu0 %v677
    %916 = vmatprep.subr.mxu0 %v685
    %917 = vmatpush1.msra.mxu0 %v684
    %918 = vmatprep.subr.mxu0 %v692
    %919 = vmatpush1.msra.mxu0 %v691
    %920 = vmatprep.subr.mxu0 %v699
    %921 = vmatpush1.msra.mxu0 %v698
    %922 = vmatprep.subr.mxu0 %v706
    %923 = vmatpush1.msra.mxu0 %v705
    %924 = vmatprep.subr.mxu0 %v713
    %925 = vmatpush1.msra.mxu0 %v712
    %926 = vmatprep.subr.mxu0 0.0
    %927 = vmatpush1.msra.mxu0 0.0
    %928 = vmatprep.subr.mxu0 0.0
    %929 = vmatpush1.msra.mxu0 0.0
    %930 = vmatprep.subr.mxu0 0.0
    %931 = vmatpush1.msra.mxu0 0.0
    %932 = vmatprep.subr.mxu0 0.0
    %933 = vmatpush1.msra.mxu0 0.0
    %934 = vmatprep.subr.mxu0 0.0
    %935 = vmatpush1.msra.mxu0 0.0
    %936 = vmatprep.subr.mxu0 0.0
    %937 = vmatpush1.msra.mxu0 0.0
    %938 = vmatprep.subr.mxu0 0.0
    %939 = vmatpush1.msra.mxu0 0.0
    %940 = vmatprep.subr.mxu0 0.0
    %941 = vmatpush1.msra.mxu0 0.0
    %942 = vmatprep.subr.mxu0 0.0
    %943 = vmatpush1.msra.mxu0 0.0
    %944 = vmatprep.subr.mxu0 0.0
    %945 = vmatpush1.msra.mxu0 0.0
    %946 = vmatprep.subr.mxu0 0.0
    %947 = vmatpush1.msra.mxu0 0.0
    %948 = vmatprep.subr.mxu0 0.0
    %949 = vmatpush1.msra.mxu0 0.0
    %950 = vmatprep.subr.mxu0 0.0
    %951 = vmatpush1.msra.mxu0 0.0
    %952 = vmatprep.subr.mxu0 0.0
    %953 = vmatpush1.msra.mxu0 0.0
    %954 = vmatprep.subr.mxu0 0.0
    %955 = vmatpush1.msra.mxu0 0.0
    %956 = vmatprep.subr.mxu0 0.0
    %957 = vmatpush1.msra.mxu0 0.0
    %958 = vmatprep.mubr.f32.mxu0 0.0
    %959 = vmatmul.mubr.f32.gmra.mrb[0].mxu0 %v602
    %v960 = vpop.f32.mrb[0].mxu0
    %v961 = vadd.f32 %v736, %v960
    %v962 = vpop.f32.mrb[0].mxu0
    %v963 = vadd.f32 %v740, %v962
    %964 = vdwg.mxu0
    %965 = vmatprep.subr.mxu0 0.0
    %966 = vmatpush1.msra.mxu0 %v609
    %967 = vmatprep.subr.mxu0 0.0
    %968 = vmatpush1.msra.mxu0 %v616
    %969 = vmatprep.subr.mxu0 0.0
    %970 = vmatpush1.msra.mxu0 %v623
    %971 = vmatprep.subr.mxu0 0.0
    %972 = vmatpush1.msra.mxu0 %v630
    %973 = vmatprep.subr.mxu0 0.0
    %974 = vmatpush1.msra.mxu0 %v637
    %975 = vmatprep.subr.mxu0 0.0
    %976 = vmatpush1.msra.mxu0 %v644
    %977 = vmatprep.subr.mxu0 0.0
    %978 = vmatpush1.msra.mxu0 %v651
    %979 = vmatprep.subr.mxu0 0.0
    %980 = vmatpush1.msra.mxu0 %v658
    %981 = vmatprep.subr.mxu0 0.0
    %982 = vmatpush1.msra.mxu0 %v665
    %983 = vmatprep.subr.mxu0 0.0
    %984 = vmatpush1.msra.mxu0 %v672
    %985 = vmatprep.subr.mxu0 0.0
    %986 = vmatpush1.msra.mxu0 %v679
    %987 = vmatprep.subr.mxu0 0.0
    %988 = vmatpush1.msra.mxu0 %v686
    %989 = vmatprep.subr.mxu0 0.0
    %990 = vmatpush1.msra.mxu0 %v693
    %991 = vmatprep.subr.mxu0 0.0
    %992 = vmatpush1.msra.mxu0 %v700
    %993 = vmatprep.subr.mxu0 0.0
    %994 = vmatpush1.msra.mxu0 %v707
    %995 = vmatprep.subr.mxu0 0.0
    %996 = vmatpush1.msra.mxu0 %v714
    %997 = vmatprep.subr.mxu0 0.0
    %998 = vmatpush1.msra.mxu0 0.0
    %999 = vmatprep.subr.mxu0 0.0
    %1000 = vmatpush1.msra.mxu0 0.0
    %1001 = vmatprep.subr.mxu0 0.0
    %1002 = vmatpush1.msra.mxu0 0.0
    %1003 = vmatprep.subr.mxu0 0.0
    %1004 = vmatpush1.msra.mxu0 0.0
    %1005 = vmatprep.subr.mxu0 0.0
    %1006 = vmatpush1.msra.mxu0 0.0
    %1007 = vmatprep.subr.mxu0 0.0
    %1008 = vmatpush1.msra.mxu0 0.0
    %1009 = vmatprep.subr.mxu0 0.0
    %1010 = vmatpush1.msra.mxu0 0.0
    %1011 = vmatprep.subr.mxu0 0.0
    %1012 = vmatpush1.msra.mxu0 0.0
    %1013 = vmatprep.subr.mxu0 0.0
    %1014 = vmatpush1.msra.mxu0 0.0
    %1015 = vmatprep.subr.mxu0 0.0
    %1016 = vmatpush1.msra.mxu0 0.0
    %1017 = vmatprep.subr.mxu0 0.0
    %1018 = vmatpush1.msra.mxu0 0.0
    %1019 = vmatprep.subr.mxu0 0.0
    %1020 = vmatpush1.msra.mxu0 0.0
    %1021 = vmatprep.subr.mxu0 0.0
    %1022 = vmatpush1.msra.mxu0 0.0
    %1023 = vmatprep.subr.mxu0 0.0
    %1024 = vmatpush1.msra.mxu0 0.0
    %1025 = vmatprep.subr.mxu0 0.0
    %1026 = vmatpush1.msra.mxu0 0.0
    %1027 = vmatprep.subr.mxu0 0.0
    %1028 = vmatpush1.msra.mxu0 0.0
    %1029 = vmatprep.mubr.f32.mxu0 0.0
    %1030 = vmatmul.mubr.f32.gmra.mrb[0].mxu0 %v602
    %v1031 = vpop.f32.mrb[0].mxu0
    %v1032 = vadd.f32 %v744, %v1031
    %v1033 = vpop.f32.mrb[0].mxu0
    %1034 = vdwg.mxu0
    %v1042 = vcombine.low %v819, %v821
    %v1043 = vcombine.high %v819, %v821
    %v1044 = vcombine.low %v890, %v892
    %v1045 = vcombine.high %v890, %v892
    %v1047 = vunpack.c.l.s4 1983009808
    %v1048 = vunpack.c.0.s8 %v1047
    %v1049 = vlaneseq
    %v1050 = vshrl.u32 %v1049, 7
    %v1051 = vsub.s32 %v1048, %v1050
    %v1052 = vrot.slane %v1042, %v1051
    %v1054 = vunpack.c.l.s4 1983009808
    %v1055 = vunpack.c.0.s8 %v1054
    %v1056 = vlaneseq
    %v1057 = vshrl.u32 %v1056, 7
    %v1058 = vsub.s32 %v1055, %v1057
    %v1059 = vrot.slane %v1043, %v1058
    %v1061 = vunpack.c.l.s4 1983009808
    %v1062 = vunpack.c.0.s8 %v1061
    %v1063 = vlaneseq
    %v1064 = vshrl.u32 %v1063, 7
    %v1065 = vsub.s32 %v1062, %v1064
    %v1066 = vrot.slane %v1044, %v1065
    %v1068 = vunpack.c.l.s4 1983009808
    %v1069 = vunpack.c.0.s8 %v1068
    %v1070 = vlaneseq
    %v1071 = vshrl.u32 %v1070, 7
    %v1072 = vsub.s32 %v1069, %v1071
    %v1073 = vrot.slane %v1045, %v1072
    %v1074 = vcombine.low %v1052, %v1066
    %v1075 = vcombine.high %v1052, %v1066
    %v1076 = vcombine.low %v1059, %v1073
    %v1077 = vcombine.high %v1059, %v1073
    %v1078 = vcombine.low %v961, %v963
    %v1079 = vcombine.high %v961, %v963
    %v1080 = vcombine.high %v1032, %v1032
    %v1082 = vunpack.c.l.s4 1983009808
    %v1083 = vunpack.c.0.s8 %v1082
    %v1084 = vlaneseq
    %v1085 = vshrl.u32 %v1084, 7
    %v1086 = vsub.s32 %v1083, %v1085
    %v1087 = vrot.slane %v1078, %v1086
    %v1089 = vunpack.c.l.s4 1983009808
    %v1090 = vunpack.c.0.s8 %v1089
    %v1091 = vlaneseq
    %v1092 = vshrl.u32 %v1091, 7
    %v1093 = vsub.s32 %v1090, %v1092
    %v1094 = vrot.slane %v1079, %v1093
    %v1096 = vunpack.c.l.s4 1983009808
    %v1097 = vunpack.c.0.s8 %v1096
    %v1098 = vlaneseq
    %v1099 = vshrl.u32 %v1098, 7
    %v1100 = vsub.s32 %v1097, %v1099
    %v1101 = vrot.slane %v1032, %v1100
    %v1103 = vunpack.c.l.s4 1983009808
    %v1104 = vunpack.c.0.s8 %v1103
    %v1105 = vlaneseq
    %v1106 = vshrl.u32 %v1105, 7
    %v1107 = vsub.s32 %v1104, %v1106
    %v1108 = vrot.slane %v1080, %v1107
    %v1109 = vcombine.low %v1087, %v1101
    %v1110 = vcombine.high %v1087, %v1101
    %v1111 = vcombine.low %v1094, %v1108
    %v1112 = vcombine.high %v1094, %v1108
    %1121 = vst [vmem:[#allocation2] sm:$0xff] %v1074
    %vm1122 = vcmask 1041408
    %vm1123 = vcmask 1043458
    %vm1124 = vmor %vm1123, %vm1122
    %vm1125 = vcmask 128004
    %vm1126 = vmor %vm1125, %vm1124
    %1127 = vst.msk [vmem:[#allocation2 + $0x8] sm:$0x3f] %vm1126, %v1109
    %1128 = vst [vmem:[#allocation2 + $0xe] sm:$0xff] %v1075
    %1129 = vst.msk [vmem:[#allocation2 + $0x16] sm:$0x3f] %vm1126, %v1110
    %1130 = vst [vmem:[#allocation2 + $0x1c] sm:$0xff] %v1076
    %1131 = vst.msk [vmem:[#allocation2 + $0x24] sm:$0x3f] %vm1126, %v1111
    %1132 = vst [vmem:[#allocation2 + $0x2a] sm:$0xff] %v1077
    %1133 = vst.msk [vmem:[#allocation2 + $0x32] sm:$0x3f] %vm1126, %v1112
    // Predicated region
    $region30: #{tpu_custom_call.1} parent=1 // pred_check
      _
    $region31: #{tpu_custom_call.1} parent=1 // pred_check_branch
      %1135 = sbr.rel (0) target = $region33
    $region32: #{tpu_custom_call.1} parent=1 // pred_region
      %s1137 = ssub.s32 896, 224
      %1138 = vsyncadd [#allocation3], %s1137
      %s1139 = sshll.u32 [#allocation2], 4
      %s1140 = int_to_ptr.vmem [resolvable:$true] %s1139
      %1145 = dma.vmem_to_hbm [thread:$0]  %s1140, 224, %s7, [#allocation3], 224, 224, 14
    $region33: #{tpu_custom_call.1} parent=1 // pred_fallthru
      _
    // Predicated region
    $region34: #{tpu_custom_call.1} parent=1 // pred_check
      _
    $region35: #{tpu_custom_call.1} parent=1 // pred_check_branch
      %1147 = sbr.rel (0) target = $region37
    $region36: #{tpu_custom_call.1} parent=1 // pred_region
      %1148 = dma.done [#allocation3], 896
    $region37: #{tpu_custom_call.1} parent=1 // pred_fallthru
      _
    %1149 = vsyncpa [#allocation3], 1

// kernel: tpu_custom_call.1
$region0: #{tpu_custom_call.1}
  #allocation0 [shape = 'u32[]', space=smem, size = 0x4, offset = 0x4, fixed_abs, tag = 'smem constant byte address 0x4 - core index']
  #allocation1 [shape = 'u32[144,128]{1,0:T(1,128)}', space=vmem, size = 0x12000, scoped, tag = 'internal scratch']
  %s0 = inlined_call_operand.vmem [shape: f32[2,784], index: 0, kind: input, shape index: {}]
  %s1 = inlined_call_operand.vmem [shape: f32[784,128], index: 1, kind: input, shape index: {}]
  %s2 = inlined_call_operand.vmem [shape: f32[1,128], index: 2, kind: input, shape index: {}]
  %s3 = inlined_call_operand.vmem [shape: f32[128,128], index: 3, kind: input, shape index: {}]
  %s4 = inlined_call_operand.vmem [shape: f32[1,128], index: 4, kind: input, shape index: {}]
  %s5 = inlined_call_operand.vmem [shape: f32[128,784], index: 5, kind: input, shape index: {}]
  %s6 = inlined_call_operand.vmem [shape: f32[1,784], index: 6, kind: input, shape index: {}]
  %s7 = inlined_call_operand.hbm [shape: f32[2,784], index: 7, kind: output, shape index: {}]
  %s8 = sld [smem:[#allocation0]]
  $region38: #{tpu_custom_call.1} parent=0
    _
  %s10 = ssub.s32 1, %s8
  %s11 = scalar_select 0, %s10, %s8
  $region1: #{tpu_custom_call.1} parent=0
    #allocation2 [shape = 'u8[28672]{0}', space=vmem, size = 0x7000, scoped, tag = 'output window, operand 0, single buffered']
    #allocation3 [shape = 's32[1]{0}', space=sflag, size = 0x4, scoped, tag = 'scoped memory for tpu_custom_call.1']
    %12 = vsyncpa [#allocation3], 0
    // Predicated region
    $region2: #{tpu_custom_call.1} parent=1 // pred_check
      _
    $region3: #{tpu_custom_call.1} parent=1 // pred_check_branch
      %14 = sbr.rel (0) target = $region5
    $region4: #{tpu_custom_call.1} parent=1 // pred_region
      _
    $region5: #{tpu_custom_call.1} parent=1 // pred_fallthru
      _
    // Predicated region
    $region6: #{tpu_custom_call.1} parent=1 // pred_check
      _
    $region7: #{tpu_custom_call.1} parent=1 // pred_check_branch
      %16 = sbr.rel (0) target = $region9
    $region8: #{tpu_custom_call.1} parent=1 // pred_region
      _
    $region9: #{tpu_custom_call.1} parent=1 // pred_fallthru
      _
    // Predicated region
    $region10: #{tpu_custom_call.1} parent=1 // pred_check
      _
    $region11: #{tpu_custom_call.1} parent=1 // pred_check_branch
      %18 = sbr.rel (0) target = $region13
    $region12: #{tpu_custom_call.1} parent=1 // pred_region
      _
    $region13: #{tpu_custom_call.1} parent=1 // pred_fallthru
      _
    // Predicated region
    $region14: #{tpu_custom_call.1} parent=1 // pred_check
      _
    $region15: #{tpu_custom_call.1} parent=1 // pred_check_branch
      %20 = sbr.rel (0) target = $region17
    $region16: #{tpu_custom_call.1} parent=1 // pred_region
      _
    $region17: #{tpu_custom_call.1} parent=1 // pred_fallthru
      _
    // Predicated region
    $region18: #{tpu_custom_call.1} parent=1 // pred_check
      _
    $region19: #{tpu_custom_call.1} parent=1 // pred_check_branch
      %22 = sbr.rel (0) target = $region21
    $region20: #{tpu_custom_call.1} parent=1 // pred_region
      _
    $region21: #{tpu_custom_call.1} parent=1 // pred_fallthru
      _
    // Predicated region
    $region22: #{tpu_custom_call.1} parent=1 // pred_check
      _
    $region23: #{tpu_custom_call.1} parent=1 // pred_check_branch
      %24 = sbr.rel (0) target = $region25
    $region24: #{tpu_custom_call.1} parent=1 // pred_region
      _
    $region25: #{tpu_custom_call.1} parent=1 // pred_fallthru
      _
    // Predicated region
    $region26: #{tpu_custom_call.1} parent=1 // pred_check
      _
    $region27: #{tpu_custom_call.1} parent=1 // pred_check_branch
      %26 = sbr.rel (0) target = $region29
    $region28: #{tpu_custom_call.1} parent=1 // pred_region
      _
    $region29: #{tpu_custom_call.1} parent=1 // pred_fallthru
      _
    %v27 = vld [vmem:[%s0] sm:$0xff]
    %v28 = vld [vmem:[%s0 + $0x8] sm:$0x3f]
    %v29 = vld [vmem:[%s0 + $0xe] sm:$0xff]
    %v30 = vld [vmem:[%s0 + $0x16] sm:$0x3f]
    %v31 = vld [vmem:[%s0 + $0x1c] sm:$0xff]
    %v32 = vld [vmem:[%s0 + $0x24] sm:$0x3f]
    %v33 = vld [vmem:[%s0 + $0x2a] sm:$0xff]
    %v34 = vld [vmem:[%s0 + $0x32] sm:$0x3f]
    %v35 = vld [vmem:[%s1] sm:$0xff]
    %v36 = vld [vmem:[%s1 + $0x8] sm:$0xff]
    %v37 = vld [vmem:[%s1 + $0x10] sm:$0xff]
    %v38 = vld [vmem:[%s1 + $0x18] sm:$0xff]
    %v39 = vld [vmem:[%s1 + $0x20] sm:$0xff]
    %v40 = vld [vmem:[%s1 + $0x28] sm:$0xff]
    %v41 = vld [vmem:[%s1 + $0x30] sm:$0xff]
    %v42 = vld [vmem:[%s1 + $0x38] sm:$0xff]
    %v43 = vld [vmem:[%s1 + $0x40] sm:$0xff]
    %v44 = vld [vmem:[%s1 + $0x48] sm:$0xff]
    %v45 = vld [vmem:[%s1 + $0x50] sm:$0xff]
    %v46 = vld [vmem:[%s1 + $0x58] sm:$0xff]
    %v47 = vld [vmem:[%s1 + $0x60] sm:$0xff]
    %v48 = vld [vmem:[%s1 + $0x68] sm:$0xff]
    %v49 = vld [vmem:[%s1 + $0x70] sm:$0xff]
    %v50 = vld [vmem:[%s1 + $0x78] sm:$0xff]
    %v51 = vld [vmem:[%s1 + $0x80] sm:$0xff]
    %v52 = vld [vmem:[%s1 + $0x88] sm:$0xff]
    %v53 = vld [vmem:[%s1 + $0x90] sm:$0xff]
    %v54 = vld [vmem:[%s1 + $0x98] sm:$0xff]
    %v55 = vld [vmem:[%s1 + $0xa0] sm:$0xff]
    %v56 = vld [vmem:[%s1 + $0xa8] sm:$0xff]
    %v57 = vld [vmem:[%s1 + $0xb0] sm:$0xff]
    %v58 = vld [vmem:[%s1 + $0xb8] sm:$0xff]
    %v59 = vld [vmem:[%s1 + $0xc0] sm:$0xff]
    %v60 = vld [vmem:[%s1 + $0xc8] sm:$0xff]
    %v61 = vld [vmem:[%s1 + $0xd0] sm:$0xff]
    %v62 = vld [vmem:[%s1 + $0xd8] sm:$0xff]
    %v63 = vld [vmem:[%s1 + $0xe0] sm:$0xff]
    %v64 = vld [vmem:[%s1 + $0xe8] sm:$0xff]
    %v65 = vld [vmem:[%s1 + $0xf0] sm:$0xff]
    %v66 = vld [vmem:[%s1 + $0xf8] sm:$0xff]
    %v67 = vld [vmem:[%s1 + $0x100] sm:$0xff]
    %v68 = vld [vmem:[%s1 + $0x108] sm:$0xff]
    %v69 = vld [vmem:[%s1 + $0x110] sm:$0xff]
    %v70 = vld [vmem:[%s1 + $0x118] sm:$0xff]
    %v71 = vld [vmem:[%s1 + $0x120] sm:$0xff]
    %v72 = vld [vmem:[%s1 + $0x128] sm:$0xff]
    %v73 = vld [vmem:[%s1 + $0x130] sm:$0xff]
    %v74 = vld [vmem:[%s1 + $0x138] sm:$0xff]
    %v75 = vld [vmem:[%s1 + $0x140] sm:$0xff]
    %v76 = vld [vmem:[%s1 + $0x148] sm:$0xff]
    %v77 = vld [vmem:[%s1 + $0x150] sm:$0xff]
    %v78 = vld [vmem:[%s1 + $0x158] sm:$0xff]
    %v79 = vld [vmem:[%s1 + $0x160] sm:$0xff]
    %v80 = vld [vmem:[%s1 + $0x168] sm:$0xff]
    %v81 = vld [vmem:[%s1 + $0x170] sm:$0xff]
    %v82 = vld [vmem:[%s1 + $0x178] sm:$0xff]
    %v83 = vld [vmem:[%s1 + $0x180] sm:$0xff]
    %v84 = vld [vmem:[%s1 + $0x188] sm:$0xff]
    %v85 = vld [vmem:[%s1 + $0x190] sm:$0xff]
    %v86 = vld [vmem:[%s1 + $0x198] sm:$0xff]
    %v87 = vld [vmem:[%s1 + $0x1a0] sm:$0xff]
    %v88 = vld [vmem:[%s1 + $0x1a8] sm:$0xff]
    %v89 = vld [vmem:[%s1 + $0x1b0] sm:$0xff]
    %v90 = vld [vmem:[%s1 + $0x1b8] sm:$0xff]
    %v91 = vld [vmem:[%s1 + $0x1c0] sm:$0xff]
    %v92 = vld [vmem:[%s1 + $0x1c8] sm:$0xff]
    %v93 = vld [vmem:[%s1 + $0x1d0] sm:$0xff]
    %v94 = vld [vmem:[%s1 + $0x1d8] sm:$0xff]
    %v95 = vld [vmem:[%s1 + $0x1e0] sm:$0xff]
    %v96 = vld [vmem:[%s1 + $0x1e8] sm:$0xff]
    %v97 = vld [vmem:[%s1 + $0x1f0] sm:$0xff]
    %v98 = vld [vmem:[%s1 + $0x1f8] sm:$0xff]
    %v99 = vld [vmem:[%s1 + $0x200] sm:$0xff]
    %v100 = vld [vmem:[%s1 + $0x208] sm:$0xff]
    %v101 = vld [vmem:[%s1 + $0x210] sm:$0xff]
    %v102 = vld [vmem:[%s1 + $0x218] sm:$0xff]
    %v103 = vld [vmem:[%s1 + $0x220] sm:$0xff]
    %v104 = vld [vmem:[%s1 + $0x228] sm:$0xff]
    %v105 = vld [vmem:[%s1 + $0x230] sm:$0xff]
    %v106 = vld [vmem:[%s1 + $0x238] sm:$0xff]
    %v107 = vld [vmem:[%s1 + $0x240] sm:$0xff]
    %v108 = vld [vmem:[%s1 + $0x248] sm:$0xff]
    %v109 = vld [vmem:[%s1 + $0x250] sm:$0xff]
    %v110 = vld [vmem:[%s1 + $0x258] sm:$0xff]
    %v111 = vld [vmem:[%s1 + $0x260] sm:$0xff]
    %v112 = vld [vmem:[%s1 + $0x268] sm:$0xff]
    %v113 = vld [vmem:[%s1 + $0x270] sm:$0xff]
    %v114 = vld [vmem:[%s1 + $0x278] sm:$0xff]
    %v115 = vld [vmem:[%s1 + $0x280] sm:$0xff]
    %v116 = vld [vmem:[%s1 + $0x288] sm:$0xff]
    %v117 = vld [vmem:[%s1 + $0x290] sm:$0xff]
    %v118 = vld [vmem:[%s1 + $0x298] sm:$0xff]
    %v119 = vld [vmem:[%s1 + $0x2a0] sm:$0xff]
    %v120 = vld [vmem:[%s1 + $0x2a8] sm:$0xff]
    %v121 = vld [vmem:[%s1 + $0x2b0] sm:$0xff]
    %v122 = vld [vmem:[%s1 + $0x2b8] sm:$0xff]
    %v123 = vld [vmem:[%s1 + $0x2c0] sm:$0xff]
    %v124 = vld [vmem:[%s1 + $0x2c8] sm:$0xff]
    %v125 = vld [vmem:[%s1 + $0x2d0] sm:$0xff]
    %v126 = vld [vmem:[%s1 + $0x2d8] sm:$0xff]
    %v127 = vld [vmem:[%s1 + $0x2e0] sm:$0xff]
    %v128 = vld [vmem:[%s1 + $0x2e8] sm:$0xff]
    %v129 = vld [vmem:[%s1 + $0x2f0] sm:$0xff]
    %v130 = vld [vmem:[%s1 + $0x2f8] sm:$0xff]
    %v131 = vld [vmem:[%s1 + $0x300] sm:$0xff]
    %v132 = vld [vmem:[%s1 + $0x308] sm:$0xff]
    %v133 = vld [vmem:[%s2] sm:$0x1]
    %v135 = vlaneseq
    %v136 = vshrl.u32 %v135, 7
    %v137 = vsub.s32 0, %v136
    %v138 = vrot.slane %v133, %v137
    %v148 = vcombine.low %v27, %v29
    %v149 = vcombine.high %v27, %v29
    %v150 = vcombine.low %v31, %v33
    %v151 = vcombine.high %v31, %v33
    %v153 = vunpack.c.l.s4 1983009808
    %v154 = vunpack.c.0.s8 %v153
    %v155 = vlaneseq
    %v156 = vshrl.u32 %v155, 7
    %v157 = vsub.s32 %v154, %v156
    %v158 = vrot.slane %v148, %v157
    %v160 = vunpack.c.l.s4 1983009808
    %v161 = vunpack.c.0.s8 %v160
    %v162 = vlaneseq
    %v163 = vshrl.u32 %v162, 7
    %v164 = vsub.s32 %v161, %v163
    %v165 = vrot.slane %v149, %v164
    %v167 = vunpack.c.l.s4 1983009808
    %v168 = vunpack.c.0.s8 %v167
    %v169 = vlaneseq
    %v170 = vshrl.u32 %v169, 7
    %v171 = vsub.s32 %v168, %v170
    %v172 = vrot.slane %v150, %v171
    %v174 = vunpack.c.l.s4 1983009808
    %v175 = vunpack.c.0.s8 %v174
    %v176 = vlaneseq
    %v177 = vshrl.u32 %v176, 7
    %v178 = vsub.s32 %v175, %v177
    %v179 = vrot.slane %v151, %v178
    %v180 = vcombine.low %v158, %v172
    %v181 = vcombine.high %v158, %v172
    %v182 = vcombine.low %v165, %v179
    %v183 = vcombine.high %v165, %v179
    %v184 = vcombine.low %v28, %v30
    %v185 = vcombine.high %v28, %v30
    %v186 = vcombine.low %v32, %v34
    %v187 = vcombine.high %v32, %v34
    %v189 = vunpack.c.l.s4 1983009808
    %v190 = vunpack.c.0.s8 %v189
    %v191 = vlaneseq
    %v192 = vshrl.u32 %v191, 7
    %v193 = vsub.s32 %v190, %v192
    %v194 = vrot.slane %v184, %v193
    %v196 = vunpack.c.l.s4 1983009808
    %v197 = vunpack.c.0.s8 %v196
    %v198 = vlaneseq
    %v199 = vshrl.u32 %v198, 7
    %v200 = vsub.s32 %v197, %v199
    %v201 = vrot.slane %v185, %v200
    %v203 = vunpack.c.l.s4 1983009808
    %v204 = vunpack.c.0.s8 %v203
    %v205 = vlaneseq
    %v206 = vshrl.u32 %v205, 7
    %v207 = vsub.s32 %v204, %v206
    %v208 = vrot.slane %v186, %v207
    %v210 = vunpack.c.l.s4 1983009808
    %v211 = vunpack.c.0.s8 %v210
    %v212 = vlaneseq
    %v213 = vshrl.u32 %v212, 7
    %v214 = vsub.s32 %v211, %v213
    %v215 = vrot.slane %v187, %v214
    %v216 = vcombine.low %v194, %v208
    %v217 = vcombine.high %v194, %v208
    %v218 = vcombine.low %v201, %v215
    %vm225 = vcmask 130048
    %v226 = vsel %vm225, %v218, 0
    %228 = vmatprep.subr.mxu0 0.0
    %229 = vmatpush1.msra.mxu0 %v35
    %230 = vmatprep.subr.mxu0 0.0
    %231 = vmatpush1.msra.mxu0 %v36
    %232 = vmatprep.subr.mxu0 0.0
    %233 = vmatpush1.msra.mxu0 %v37
    %234 = vmatprep.subr.mxu0 0.0
    %235 = vmatpush1.msra.mxu0 %v38
    %236 = vmatprep.subr.mxu0 0.0
    %237 = vmatpush1.msra.mxu0 %v39
    %238 = vmatprep.subr.mxu0 0.0
    %239 = vmatpush1.msra.mxu0 %v40
    %240 = vmatprep.subr.mxu0 0.0
    %241 = vmatpush1.msra.mxu0 %v41
    %242 = vmatprep.subr.mxu0 0.0
    %243 = vmatpush1.msra.mxu0 %v42
    %244 = vmatprep.subr.mxu0 0.0
    %245 = vmatpush1.msra.mxu0 %v43
    %246 = vmatprep.subr.mxu0 0.0
    %247 = vmatpush1.msra.mxu0 %v44
    %248 = vmatprep.subr.mxu0 0.0
    %249 = vmatpush1.msra.mxu0 %v45
    %250 = vmatprep.subr.mxu0 0.0
    %251 = vmatpush1.msra.mxu0 %v46
    %252 = vmatprep.subr.mxu0 0.0
    %253 = vmatpush1.msra.mxu0 %v47
    %254 = vmatprep.subr.mxu0 0.0
    %255 = vmatpush1.msra.mxu0 %v48
    %256 = vmatprep.subr.mxu0 0.0
    %257 = vmatpush1.msra.mxu0 %v49
    %258 = vmatprep.subr.mxu0 0.0
    %259 = vmatpush1.msra.mxu0 %v50
    %260 = vmatprep.subr.mxu0 0.0
    %261 = vmatpush1.msra.mxu0 %v51
    %262 = vmatprep.subr.mxu0 0.0
    %263 = vmatpush1.msra.mxu0 %v52
    %264 = vmatprep.subr.mxu0 0.0
    %265 = vmatpush1.msra.mxu0 %v53
    %266 = vmatprep.subr.mxu0 0.0
    %267 = vmatpush1.msra.mxu0 %v54
    %268 = vmatprep.subr.mxu0 0.0
    %269 = vmatpush1.msra.mxu0 %v55
    %270 = vmatprep.subr.mxu0 0.0
    %271 = vmatpush1.msra.mxu0 %v56
    %272 = vmatprep.subr.mxu0 0.0
    %273 = vmatpush1.msra.mxu0 %v57
    %274 = vmatprep.subr.mxu0 0.0
    %275 = vmatpush1.msra.mxu0 %v58
    %276 = vmatprep.subr.mxu0 0.0
    %277 = vmatpush1.msra.mxu0 %v59
    %278 = vmatprep.subr.mxu0 0.0
    %279 = vmatpush1.msra.mxu0 %v60
    %280 = vmatprep.subr.mxu0 0.0
    %281 = vmatpush1.msra.mxu0 %v61
    %282 = vmatprep.subr.mxu0 0.0
    %283 = vmatpush1.msra.mxu0 %v62
    %284 = vmatprep.subr.mxu0 0.0
    %285 = vmatpush1.msra.mxu0 %v63
    %286 = vmatprep.subr.mxu0 0.0
    %287 = vmatpush1.msra.mxu0 %v64
    %288 = vmatprep.subr.mxu0 0.0
    %289 = vmatpush1.msra.mxu0 %v65
    %290 = vmatprep.subr.mxu0 0.0
    %291 = vmatpush1.msra.mxu0 %v66
    %292 = vmatprep.mubr.f32.mxu0 %v181
    %293 = vmatmul.mubr.f32.gmra.mrb[0].mxu0 %v180
    %v294 = vpop.f32.mrb[0].mxu0
    %v295 = vadd.f32 %v138, %v294
    %v296 = vpop.f32.mrb[0].mxu0
    %297 = vdwg.mxu0
    %298 = vmatprep.subr.mxu0 0.0
    %299 = vmatpush1.msra.mxu0 %v67
    %300 = vmatprep.subr.mxu0 0.0
    %301 = vmatpush1.msra.mxu0 %v68
    %302 = vmatprep.subr.mxu0 0.0
    %303 = vmatpush1.msra.mxu0 %v69
    %304 = vmatprep.subr.mxu0 0.0
    %305 = vmatpush1.msra.mxu0 %v70
    %306 = vmatprep.subr.mxu0 0.0
    %307 = vmatpush1.msra.mxu0 %v71
    %308 = vmatprep.subr.mxu0 0.0
    %309 = vmatpush1.msra.mxu0 %v72
    %310 = vmatprep.subr.mxu0 0.0
    %311 = vmatpush1.msra.mxu0 %v73
    %312 = vmatprep.subr.mxu0 0.0
    %313 = vmatpush1.msra.mxu0 %v74
    %314 = vmatprep.subr.mxu0 0.0
    %315 = vmatpush1.msra.mxu0 %v75
    %316 = vmatprep.subr.mxu0 0.0
    %317 = vmatpush1.msra.mxu0 %v76
    %318 = vmatprep.subr.mxu0 0.0
    %319 = vmatpush1.msra.mxu0 %v77
    %320 = vmatprep.subr.mxu0 0.0
    %321 = vmatpush1.msra.mxu0 %v78
    %322 = vmatprep.subr.mxu0 0.0
    %323 = vmatpush1.msra.mxu0 %v79
    %324 = vmatprep.subr.mxu0 0.0
    %325 = vmatpush1.msra.mxu0 %v80
    %326 = vmatprep.subr.mxu0 0.0
    %327 = vmatpush1.msra.mxu0 %v81
    %328 = vmatprep.subr.mxu0 0.0
    %329 = vmatpush1.msra.mxu0 %v82
    %330 = vmatprep.subr.mxu0 0.0
    %331 = vmatpush1.msra.mxu0 %v83
    %332 = vmatprep.subr.mxu0 0.0
    %333 = vmatpush1.msra.mxu0 %v84
    %334 = vmatprep.subr.mxu0 0.0
    %335 = vmatpush1.msra.mxu0 %v85
    %336 = vmatprep.subr.mxu0 0.0
    %337 = vmatpush1.msra.mxu0 %v86
    %338 = vmatprep.subr.mxu0 0.0
    %339 = vmatpush1.msra.mxu0 %v87
    %340 = vmatprep.subr.mxu0 0.0
    %341 = vmatpush1.msra.mxu0 %v88
    %342 = vmatprep.subr.mxu0 0.0
    %343 = vmatpush1.msra.mxu0 %v89
    %344 = vmatprep.subr.mxu0 0.0
    %345 = vmatpush1.msra.mxu0 %v90
    %346 = vmatprep.subr.mxu0 0.0
    %347 = vmatpush1.msra.mxu0 %v91
    %348 = vmatprep.subr.mxu0 0.0
    %349 = vmatpush1.msra.mxu0 %v92
    %350 = vmatprep.subr.mxu0 0.0
    %351 = vmatpush1.msra.mxu0 %v93
    %352 = vmatprep.subr.mxu0 0.0
    %353 = vmatpush1.msra.mxu0 %v94
    %354 = vmatprep.subr.mxu0 0.0
    %355 = vmatpush1.msra.mxu0 %v95
    %356 = vmatprep.subr.mxu0 0.0
    %357 = vmatpush1.msra.mxu0 %v96
    %358 = vmatprep.subr.mxu0 0.0
    %359 = vmatpush1.msra.mxu0 %v97
    %360 = vmatprep.subr.mxu0 0.0
    %361 = vmatpush1.msra.mxu0 %v98
    %362 = vmatprep.mubr.f32.mxu0 %v183
    %363 = vmatmul.mubr.f32.gmra.mrb[0].mxu0 %v182
    %v364 = vpop.f32.mrb[0].mxu0
    %v365 = vadd.f32 %v295, %v364
    %v366 = vpop.f32.mrb[0].mxu0
    %367 = vdwg.mxu0
    %368 = vmatprep.subr.mxu0 0.0
    %369 = vmatpush1.msra.mxu0 %v99
    %370 = vmatprep.subr.mxu0 0.0
    %371 = vmatpush1.msra.mxu0 %v100
    %372 = vmatprep.subr.mxu0 0.0
    %373 = vmatpush1.msra.mxu0 %v101
    %374 = vmatprep.subr.mxu0 0.0
    %375 = vmatpush1.msra.mxu0 %v102
    %376 = vmatprep.subr.mxu0 0.0
    %377 = vmatpush1.msra.mxu0 %v103
    %378 = vmatprep.subr.mxu0 0.0
    %379 = vmatpush1.msra.mxu0 %v104
    %380 = vmatprep.subr.mxu0 0.0
    %381 = vmatpush1.msra.mxu0 %v105
    %382 = vmatprep.subr.mxu0 0.0
    %383 = vmatpush1.msra.mxu0 %v106
    %384 = vmatprep.subr.mxu0 0.0
    %385 = vmatpush1.msra.mxu0 %v107
    %386 = vmatprep.subr.mxu0 0.0
    %387 = vmatpush1.msra.mxu0 %v108
    %388 = vmatprep.subr.mxu0 0.0
    %389 = vmatpush1.msra.mxu0 %v109
    %390 = vmatprep.subr.mxu0 0.0
    %391 = vmatpush1.msra.mxu0 %v110
    %392 = vmatprep.subr.mxu0 0.0
    %393 = vmatpush1.msra.mxu0 %v111
    %394 = vmatprep.subr.mxu0 0.0
    %395 = vmatpush1.msra.mxu0 %v112
    %396 = vmatprep.subr.mxu0 0.0
    %397 = vmatpush1.msra.mxu0 %v113
    %398 = vmatprep.subr.mxu0 0.0
    %399 = vmatpush1.msra.mxu0 %v114
    %400 = vmatprep.subr.mxu0 0.0
    %401 = vmatpush1.msra.mxu0 %v115
    %402 = vmatprep.subr.mxu0 0.0
    %403 = vmatpush1.msra.mxu0 %v116
    %404 = vmatprep.subr.mxu0 0.0
    %405 = vmatpush1.msra.mxu0 %v117
    %406 = vmatprep.subr.mxu0 0.0
    %407 = vmatpush1.msra.mxu0 %v118
    %408 = vmatprep.subr.mxu0 0.0
    %409 = vmatpush1.msra.mxu0 %v119
    %410 = vmatprep.subr.mxu0 0.0
    %411 = vmatpush1.msra.mxu0 %v120
    %412 = vmatprep.subr.mxu0 0.0
    %413 = vmatpush1.msra.mxu0 %v121
    %414 = vmatprep.subr.mxu0 0.0
    %415 = vmatpush1.msra.mxu0 %v122
    %416 = vmatprep.subr.mxu0 0.0
    %417 = vmatpush1.msra.mxu0 %v123
    %418 = vmatprep.subr.mxu0 0.0
    %419 = vmatpush1.msra.mxu0 %v124
    %420 = vmatprep.subr.mxu0 0.0
    %421 = vmatpush1.msra.mxu0 %v125
    %422 = vmatprep.subr.mxu0 0.0
    %423 = vmatpush1.msra.mxu0 %v126
    %424 = vmatprep.subr.mxu0 0.0
    %425 = vmatpush1.msra.mxu0 %v127
    %426 = vmatprep.subr.mxu0 0.0
    %427 = vmatpush1.msra.mxu0 %v128
    %428 = vmatprep.subr.mxu0 0.0
    %429 = vmatpush1.msra.mxu0 %v129
    %430 = vmatprep.subr.mxu0 0.0
    %431 = vmatpush1.msra.mxu0 %v130
    %432 = vmatprep.mubr.f32.mxu0 %v217
    %433 = vmatmul.mubr.f32.gmra.mrb[0].mxu0 %v216
    %v434 = vpop.f32.mrb[0].mxu0
    %v435 = vadd.f32 %v365, %v434
    %v436 = vpop.f32.mrb[0].mxu0
    %437 = vdwg.mxu0
    %438 = vmatprep.subr.mxu0 0.0
    %439 = vmatpush1.msra.mxu0 %v131
    %440 = vmatprep.subr.mxu0 0.0
    %441 = vmatpush1.msra.mxu0 %v132
    %442 = vmatprep.subr.mxu0 0.0
    %443 = vmatpush1.msra.mxu0 0.0
    %444 = vmatprep.subr.mxu0 0.0
    %445 = vmatpush1.msra.mxu0 0.0
    %446 = vmatprep.subr.mxu0 0.0
    %447 = vmatpush1.msra.mxu0 0.0
    %448 = vmatprep.subr.mxu0 0.0
    %449 = vmatpush1.msra.mxu0 0.0
    %450 = vmatprep.subr.mxu0 0.0
    %451 = vmatpush1.msra.mxu0 0.0
    %452 = vmatprep.subr.mxu0 0.0
    %453 = vmatpush1.msra.mxu0 0.0
    %454 = vmatprep.subr.mxu0 0.0
    %455 = vmatpush1.msra.mxu0 0.0
    %456 = vmatprep.subr.mxu0 0.0
    %457 = vmatpush1.msra.mxu0 0.0
    %458 = vmatprep.subr.mxu0 0.0
    %459 = vmatpush1.msra.mxu0 0.0
    %460 = vmatprep.subr.mxu0 0.0
    %461 = vmatpush1.msra.mxu0 0.0
    %462 = vmatprep.subr.mxu0 0.0
    %463 = vmatpush1.msra.mxu0 0.0
    %464 = vmatprep.subr.mxu0 0.0
    %465 = vmatpush1.msra.mxu0 0.0
    %466 = vmatprep.subr.mxu0 0.0
    %467 = vmatpush1.msra.mxu0 0.0
    %468 = vmatprep.subr.mxu0 0.0
    %469 = vmatpush1.msra.mxu0 0.0
    %470 = vmatprep.subr.mxu0 0.0
    %471 = vmatpush1.msra.mxu0 0.0
    %472 = vmatprep.subr.mxu0 0.0
    %473 = vmatpush1.msra.mxu0 0.0
    %474 = vmatprep.subr.mxu0 0.0
    %475 = vmatpush1.msra.mxu0 0.0
    %476 = vmatprep.subr.mxu0 0.0
    %477 = vmatpush1.msra.mxu0 0.0
    %478 = vmatprep.subr.mxu0 0.0
    %479 = vmatpush1.msra.mxu0 0.0
    %480 = vmatprep.subr.mxu0 0.0
    %481 = vmatpush1.msra.mxu0 0.0
    %482 = vmatprep.subr.mxu0 0.0
    %483 = vmatpush1.msra.mxu0 0.0
    %484 = vmatprep.subr.mxu0 0.0
    %485 = vmatpush1.msra.mxu0 0.0
    %486 = vmatprep.subr.mxu0 0.0
    %487 = vmatpush1.msra.mxu0 0.0
    %488 = vmatprep.subr.mxu0 0.0
    %489 = vmatpush1.msra.mxu0 0.0
    %490 = vmatprep.subr.mxu0 0.0
    %491 = vmatpush1.msra.mxu0 0.0
    %492 = vmatprep.subr.mxu0 0.0
    %493 = vmatpush1.msra.mxu0 0.0
    %494 = vmatprep.subr.mxu0 0.0
    %495 = vmatpush1.msra.mxu0 0.0
    %496 = vmatprep.subr.mxu0 0.0
    %497 = vmatpush1.msra.mxu0 0.0
    %498 = vmatprep.subr.mxu0 0.0
    %499 = vmatpush1.msra.mxu0 0.0
    %500 = vmatprep.subr.mxu0 0.0
    %501 = vmatpush1.msra.mxu0 0.0
    %502 = vmatprep.mubr.f32.mxu0 0.0
    %503 = vmatmul.mubr.f32.gmra.mrb[0].mxu0 %v226
    %v504 = vpop.f32.mrb[0].mxu0
    %v505 = vadd.f32 %v435, %v504
    %v506 = vpop.f32.mrb[0].mxu0
    %507 = vdwg.mxu0
    %v508 = vmax.f32 %v505, 0.0
    %v509 = vld [vmem:[%s3] sm:$0xff]
    %v510 = vld [vmem:[%s3 + $0x8] sm:$0xff]
    %v511 = vld [vmem:[%s3 + $0x10] sm:$0xff]
    %v512 = vld [vmem:[%s3 + $0x18] sm:$0xff]
    %v513 = vld [vmem:[%s3 + $0x20] sm:$0xff]
    %v514 = vld [vmem:[%s3 + $0x28] sm:$0xff]
    %v515 = vld [vmem:[%s3 + $0x30] sm:$0xff]
    %v516 = vld [vmem:[%s3 + $0x38] sm:$0xff]
    %v517 = vld [vmem:[%s3 + $0x40] sm:$0xff]
    %v518 = vld [vmem:[%s3 + $0x48] sm:$0xff]
    %v519 = vld [vmem:[%s3 + $0x50] sm:$0xff]
    %v520 = vld [vmem:[%s3 + $0x58] sm:$0xff]
    %v521 = vld [vmem:[%s3 + $0x60] sm:$0xff]
    %v522 = vld [vmem:[%s3 + $0x68] sm:$0xff]
    %v523 = vld [vmem:[%s3 + $0x70] sm:$0xff]
    %v524 = vld [vmem:[%s3 + $0x78] sm:$0xff]
    %v525 = vld [vmem:[%s4] sm:$0x1]
    %v527 = vlaneseq
    %v528 = vshrl.u32 %v527, 7
    %v529 = vsub.s32 0, %v528
    %v530 = vrot.slane %v525, %v529
    %532 = vmatprep.subr.mxu0 0.0
    %533 = vmatpush1.msra.mxu0 %v509
    %534 = vmatprep.subr.mxu0 0.0
    %535 = vmatpush1.msra.mxu0 %v510
    %536 = vmatprep.subr.mxu0 0.0
    %537 = vmatpush1.msra.mxu0 %v511
    %538 = vmatprep.subr.mxu0 0.0
    %539 = vmatpush1.msra.mxu0 %v512
    %540 = vmatprep.subr.mxu0 0.0
    %541 = vmatpush1.msra.mxu0 %v513
    %542 = vmatprep.subr.mxu0 0.0
    %543 = vmatpush1.msra.mxu0 %v514
    %544 = vmatprep.subr.mxu0 0.0
    %545 = vmatpush1.msra.mxu0 %v515
    %546 = vmatprep.subr.mxu0 0.0
    %547 = vmatpush1.msra.mxu0 %v516
    %548 = vmatprep.subr.mxu0 0.0
    %549 = vmatpush1.msra.mxu0 %v517
    %550 = vmatprep.subr.mxu0 0.0
    %551 = vmatpush1.msra.mxu0 %v518
    %552 = vmatprep.subr.mxu0 0.0
    %553 = vmatpush1.msra.mxu0 %v519
    %554 = vmatprep.subr.mxu0 0.0
    %555 = vmatpush1.msra.mxu0 %v520
    %556 = vmatprep.subr.mxu0 0.0
    %557 = vmatpush1.msra.mxu0 %v521
    %558 = vmatprep.subr.mxu0 0.0
    %559 = vmatpush1.msra.mxu0 %v522
    %560 = vmatprep.subr.mxu0 0.0
    %561 = vmatpush1.msra.mxu0 %v523
    %562 = vmatprep.subr.mxu0 0.0
    %563 = vmatpush1.msra.mxu0 %v524
    %564 = vmatprep.subr.mxu0 0.0
    %565 = vmatpush1.msra.mxu0 0.0
    %566 = vmatprep.subr.mxu0 0.0
    %567 = vmatpush1.msra.mxu0 0.0
    %568 = vmatprep.subr.mxu0 0.0
    %569 = vmatpush1.msra.mxu0 0.0
    %570 = vmatprep.subr.mxu0 0.0
    %571 = vmatpush1.msra.mxu0 0.0
    %572 = vmatprep.subr.mxu0 0.0
    %573 = vmatpush1.msra.mxu0 0.0
    %574 = vmatprep.subr.mxu0 0.0
    %575 = vmatpush1.msra.mxu0 0.0
    %576 = vmatprep.subr.mxu0 0.0
    %577 = vmatpush1.msra.mxu0 0.0
    %578 = vmatprep.subr.mxu0 0.0
    %579 = vmatpush1.msra.mxu0 0.0
    %580 = vmatprep.subr.mxu0 0.0
    %581 = vmatpush1.msra.mxu0 0.0
    %582 = vmatprep.subr.mxu0 0.0
    %583 = vmatpush1.msra.mxu0 0.0
    %584 = vmatprep.subr.mxu0 0.0
    %585 = vmatpush1.msra.mxu0 0.0
    %586 = vmatprep.subr.mxu0 0.0
    %587 = vmatpush1.msra.mxu0 0.0
    %588 = vmatprep.subr.mxu0 0.0
    %589 = vmatpush1.msra.mxu0 0.0
    %590 = vmatprep.subr.mxu0 0.0
    %591 = vmatpush1.msra.mxu0 0.0
    %592 = vmatprep.subr.mxu0 0.0
    %593 = vmatpush1.msra.mxu0 0.0
    %594 = vmatprep.subr.mxu0 0.0
    %595 = vmatpush1.msra.mxu0 0.0
    %596 = vmatprep.mubr.f32.mxu0 0.0
    %597 = vmatmul.mubr.f32.gmra.mrb[0].mxu0 %v508
    %v598 = vpop.f32.mrb[0].mxu0
    %v599 = vadd.f32 %v530, %v598
    %v600 = vpop.f32.mrb[0].mxu0
    %601 = vdwg.mxu0
    %v602 = vmax.f32 %v599, 0.0
    %v603 = vld [vmem:[%s5] sm:$0xff]
    %v604 = vld [vmem:[%s5 + $0x8] sm:$0xff]
    %v605 = vld [vmem:[%s5 + $0x10] sm:$0xff]
    %v606 = vld [vmem:[%s5 + $0x18] sm:$0xff]
    %v607 = vld [vmem:[%s5 + $0x20] sm:$0xff]
    %v608 = vld [vmem:[%s5 + $0x28] sm:$0xff]
    %v609 = vld [vmem:[%s5 + $0x30] sm:$0xff]
    %v610 = vld [vmem:[%s5 + $0x38] sm:$0xff]
    %v611 = vld [vmem:[%s5 + $0x40] sm:$0xff]
    %v612 = vld [vmem:[%s5 + $0x48] sm:$0xff]
    %v613 = vld [vmem:[%s5 + $0x50] sm:$0xff]
    %v614 = vld [vmem:[%s5 + $0x58] sm:$0xff]
    %v615 = vld [vmem:[%s5 + $0x60] sm:$0xff]
    %v616 = vld [vmem:[%s5 + $0x68] sm:$0xff]
    %v617 = vld [vmem:[%s5 + $0x70] sm:$0xff]
    %v618 = vld [vmem:[%s5 + $0x78] sm:$0xff]
    %v619 = vld [vmem:[%s5 + $0x80] sm:$0xff]
    %v620 = vld [vmem:[%s5 + $0x88] sm:$0xff]
    %v621 = vld [vmem:[%s5 + $0x90] sm:$0xff]
    %v622 = vld [vmem:[%s5 + $0x98] sm:$0xff]
    %v623 = vld [vmem:[%s5 + $0xa0] sm:$0xff]
    %v624 = vld [vmem:[%s5 + $0xa8] sm:$0xff]
    %v625 = vld [vmem:[%s5 + $0xb0] sm:$0xff]
    %v626 = vld [vmem:[%s5 + $0xb8] sm:$0xff]
    %v627 = vld [vmem:[%s5 + $0xc0] sm:$0xff]
    %v628 = vld [vmem:[%s5 + $0xc8] sm:$0xff]
    %v629 = vld [vmem:[%s5 + $0xd0] sm:$0xff]
    %v630 = vld [vmem:[%s5 + $0xd8] sm:$0xff]
    %v631 = vld [vmem:[%s5 + $0xe0] sm:$0xff]
    %v632 = vld [vmem:[%s5 + $0xe8] sm:$0xff]
    %v633 = vld [vmem:[%s5 + $0xf0] sm:$0xff]
    %v634 = vld [vmem:[%s5 + $0xf8] sm:$0xff]
    %v635 = vld [vmem:[%s5 + $0x100] sm:$0xff]
    %v636 = vld [vmem:[%s5 + $0x108] sm:$0xff]
    %v637 = vld [vmem:[%s5 + $0x110] sm:$0xff]
    %v638 = vld [vmem:[%s5 + $0x118] sm:$0xff]
    %v639 = vld [vmem:[%s5 + $0x120] sm:$0xff]
    %v640 = vld [vmem:[%s5 + $0x128] sm:$0xff]
    %v641 = vld [vmem:[%s5 + $0x130] sm:$0xff]
    %v642 = vld [vmem:[%s5 + $0x138] sm:$0xff]
    %v643 = vld [vmem:[%s5 + $0x140] sm:$0xff]
    %v644 = vld [vmem:[%s5 + $0x148] sm:$0xff]
    %v645 = vld [vmem:[%s5 + $0x150] sm:$0xff]
    %v646 = vld [vmem:[%s5 + $0x158] sm:$0xff]
    %v647 = vld [vmem:[%s5 + $0x160] sm:$0xff]
    %v648 = vld [vmem:[%s5 + $0x168] sm:$0xff]
    %v649 = vld [vmem:[%s5 + $0x170] sm:$0xff]
    %v650 = vld [vmem:[%s5 + $0x178] sm:$0xff]
    %v651 = vld [vmem:[%s5 + $0x180] sm:$0xff]
    %v652 = vld [vmem:[%s5 + $0x188] sm:$0xff]
    %v653 = vld [vmem:[%s5 + $0x190] sm:$0xff]
    %v654 = vld [vmem:[%s5 + $0x198] sm:$0xff]
    %v655 = vld [vmem:[%s5 + $0x1a0] sm:$0xff]
    %v656 = vld [vmem:[%s5 + $0x1a8] sm:$0xff]
    %v657 = vld [vmem:[%s5 + $0x1b0] sm:$0xff]
    %v658 = vld [vmem:[%s5 + $0x1b8] sm:$0xff]
    %v659 = vld [vmem:[%s5 + $0x1c0] sm:$0xff]
    %v660 = vld [vmem:[%s5 + $0x1c8] sm:$0xff]
    %v661 = vld [vmem:[%s5 + $0x1d0] sm:$0xff]
    %v662 = vld [vmem:[%s5 + $0x1d8] sm:$0xff]
    %v663 = vld [vmem:[%s5 + $0x1e0] sm:$0xff]
    %v664 = vld [vmem:[%s5 + $0x1e8] sm:$0xff]
    %v665 = vld [vmem:[%s5 + $0x1f0] sm:$0xff]
    %v666 = vld [vmem:[%s5 + $0x1f8] sm:$0xff]
    %v667 = vld [vmem:[%s5 + $0x200] sm:$0xff]
    %v668 = vld [vmem:[%s5 + $0x208] sm:$0xff]
    %v669 = vld [vmem:[%s5 + $0x210] sm:$0xff]
    %v670 = vld [vmem:[%s5 + $0x218] sm:$0xff]
    %v671 = vld [vmem:[%s5 + $0x220] sm:$0xff]
    %v672 = vld [vmem:[%s5 + $0x228] sm:$0xff]
    %v673 = vld [vmem:[%s5 + $0x230] sm:$0xff]
    %v674 = vld [vmem:[%s5 + $0x238] sm:$0xff]
    %v675 = vld [vmem:[%s5 + $0x240] sm:$0xff]
    %v676 = vld [vmem:[%s5 + $0x248] sm:$0xff]
    %v677 = vld [vmem:[%s5 + $0x250] sm:$0xff]
    %v678 = vld [vmem:[%s5 + $0x258] sm:$0xff]
    %v679 = vld [vmem:[%s5 + $0x260] sm:$0xff]
    %v680 = vld [vmem:[%s5 + $0x268] sm:$0xff]
    %v681 = vld [vmem:[%s5 + $0x270] sm:$0xff]
    %v682 = vld [vmem:[%s5 + $0x278] sm:$0xff]
    %v683 = vld [vmem:[%s5 + $0x280] sm:$0xff]
    %v684 = vld [vmem:[%s5 + $0x288] sm:$0xff]
    %v685 = vld [vmem:[%s5 + $0x290] sm:$0xff]
    %v686 = vld [vmem:[%s5 + $0x298] sm:$0xff]
    %v687 = vld [vmem:[%s5 + $0x2a0] sm:$0xff]
    %v688 = vld [vmem:[%s5 + $0x2a8] sm:$0xff]
    %v689 = vld [vmem:[%s5 + $0x2b0] sm:$0xff]
    %v690 = vld [vmem:[%s5 + $0x2b8] sm:$0xff]
    %v691 = vld [vmem:[%s5 + $0x2c0] sm:$0xff]
    %v692 = vld [vmem:[%s5 + $0x2c8] sm:$0xff]
    %v693 = vld [vmem:[%s5 + $0x2d0] sm:$0xff]
    %v694 = vld [vmem:[%s5 + $0x2d8] sm:$0xff]
    %v695 = vld [vmem:[%s5 + $0x2e0] sm:$0xff]
    %v696 = vld [vmem:[%s5 + $0x2e8] sm:$0xff]
    %v697 = vld [vmem:[%s5 + $0x2f0] sm:$0xff]
    %v698 = vld [vmem:[%s5 + $0x2f8] sm:$0xff]
    %v699 = vld [vmem:[%s5 + $0x300] sm:$0xff]
    %v700 = vld [vmem:[%s5 + $0x308] sm:$0xff]
    %v701 = vld [vmem:[%s5 + $0x310] sm:$0xff]
    %v702 = vld [vmem:[%s5 + $0x318] sm:$0xff]
    %v703 = vld [vmem:[%s5 + $0x320] sm:$0xff]
    %v704 = vld [vmem:[%s5 + $0x328] sm:$0xff]
    %v705 = vld [vmem:[%s5 + $0x330] sm:$0xff]
    %v706 = vld [vmem:[%s5 + $0x338] sm:$0xff]
    %v707 = vld [vmem:[%s5 + $0x340] sm:$0xff]
    %v708 = vld [vmem:[%s5 + $0x348] sm:$0xff]
    %v709 = vld [vmem:[%s5 + $0x350] sm:$0xff]
    %v710 = vld [vmem:[%s5 + $0x358] sm:$0xff]
    %v711 = vld [vmem:[%s5 + $0x360] sm:$0xff]
    %v712 = vld [vmem:[%s5 + $0x368] sm:$0xff]
    %v713 = vld [vmem:[%s5 + $0x370] sm:$0xff]
    %v714 = vld [vmem:[%s5 + $0x378] sm:$0xff]
    %v715 = vld [vmem:[%s6] sm:$0x7f]
    %v717 = vlaneseq
    %v718 = vshrl.u32 %v717, 7
    %v719 = vsub.s32 0, %v718
    %v720 = vrot.slane %v715, %v719
    %v721 = vlaneseq
    %v722 = vshrl.u32 %v721, 7
    %v723 = vsub.s32 1, %v722
    %v724 = vrot.slane %v715, %v723
    %v725 = vlaneseq
    %v726 = vshrl.u32 %v725, 7
    %v727 = vsub.s32 2, %v726
    %v728 = vrot.slane %v715, %v727
    %v729 = vlaneseq
    %v730 = vshrl.u32 %v729, 7
    %v731 = vsub.s32 3, %v730
    %v732 = vrot.slane %v715, %v731
    %v733 = vlaneseq
    %v734 = vshrl.u32 %v733, 7
    %v735 = vsub.s32 4, %v734
    %v736 = vrot.slane %v715, %v735
    %v737 = vlaneseq
    %v738 = vshrl.u32 %v737, 7
    %v739 = vsub.s32 5, %v738
    %v740 = vrot.slane %v715, %v739
    %v741 = vlaneseq
    %v742 = vshrl.u32 %v741, 7
    %v743 = vsub.s32 6, %v742
    %v744 = vrot.slane %v715, %v743
    %752 = vmatprep.subr.mxu0 %v604
    %753 = vmatpush1.msra.mxu0 %v603
    %754 = vmatprep.subr.mxu0 %v611
    %755 = vmatpush1.msra.mxu0 %v610
    %756 = vmatprep.subr.mxu0 %v618
    %757 = vmatpush1.msra.mxu0 %v617
    %758 = vmatprep.subr.mxu0 %v625
    %759 = vmatpush1.msra.mxu0 %v624
    %760 = vmatprep.subr.mxu0 %v632
    %761 = vmatpush1.msra.mxu0 %v631
    %762 = vmatprep.subr.mxu0 %v639
    %763 = vmatpush1.msra.mxu0 %v638
    %764 = vmatprep.subr.mxu0 %v646
    %765 = vmatpush1.msra.mxu0 %v645
    %766 = vmatprep.subr.mxu0 %v653
    %767 = vmatpush1.msra.mxu0 %v652
    %768 = vmatprep.subr.mxu0 %v660
    %769 = vmatpush1.msra.mxu0 %v659
    %770 = vmatprep.subr.mxu0 %v667
    %771 = vmatpush1.msra.mxu0 %v666
    %772 = vmatprep.subr.mxu0 %v674
    %773 = vmatpush1.msra.mxu0 %v673
    %774 = vmatprep.subr.mxu0 %v681
    %775 = vmatpush1.msra.mxu0 %v680
    %776 = vmatprep.subr.mxu0 %v688
    %777 = vmatpush1.msra.mxu0 %v687
    %778 = vmatprep.subr.mxu0 %v695
    %779 = vmatpush1.msra.mxu0 %v694
    %780 = vmatprep.subr.mxu0 %v702
    %781 = vmatpush1.msra.mxu0 %v701
    %782 = vmatprep.subr.mxu0 %v709
    %783 = vmatpush1.msra.mxu0 %v708
    %784 = vmatprep.subr.mxu0 0.0
    %785 = vmatpush1.msra.mxu0 0.0
    %786 = vmatprep.subr.mxu0 0.0
    %787 = vmatpush1.msra.mxu0 0.0
    %788 = vmatprep.subr.mxu0 0.0
    %789 = vmatpush1.msra.mxu0 0.0
    %790 = vmatprep.subr.mxu0 0.0
    %791 = vmatpush1.msra.mxu0 0.0
    %792 = vmatprep.subr.mxu0 0.0
    %793 = vmatpush1.msra.mxu0 0.0
    %794 = vmatprep.subr.mxu0 0.0
    %795 = vmatpush1.msra.mxu0 0.0
    %796 = vmatprep.subr.mxu0 0.0
    %797 = vmatpush1.msra.mxu0 0.0
    %798 = vmatprep.subr.mxu0 0.0
    %799 = vmatpush1.msra.mxu0 0.0
    %800 = vmatprep.subr.mxu0 0.0
    %801 = vmatpush1.msra.mxu0 0.0
    %802 = vmatprep.subr.mxu0 0.0
    %803 = vmatpush1.msra.mxu0 0.0
    %804 = vmatprep.subr.mxu0 0.0
    %805 = vmatpush1.msra.mxu0 0.0
    %806 = vmatprep.subr.mxu0 0.0
    %807 = vmatpush1.msra.mxu0 0.0
    %808 = vmatprep.subr.mxu0 0.0
    %809 = vmatpush1.msra.mxu0 0.0
    %810 = vmatprep.subr.mxu0 0.0
    %811 = vmatpush1.msra.mxu0 0.0
    %812 = vmatprep.subr.mxu0 0.0
    %813 = vmatpush1.msra.mxu0 0.0
    %814 = vmatprep.subr.mxu0 0.0
    %815 = vmatpush1.msra.mxu0 0.0
    %816 = vmatprep.mubr.f32.mxu0 0.0
    %817 = vmatmul.mubr.f32.gmra.mrb[0].mxu0 %v602
    %v818 = vpop.f32.mrb[0].mxu0
    %v819 = vadd.f32 %v720, %v818
    %v820 = vpop.f32.mrb[0].mxu0
    %v821 = vadd.f32 %v724, %v820
    %822 = vdwg.mxu0
    %823 = vmatprep.subr.mxu0 %v606
    %824 = vmatpush1.msra.mxu0 %v605
    %825 = vmatprep.subr.mxu0 %v613
    %826 = vmatpush1.msra.mxu0 %v612
    %827 = vmatprep.subr.mxu0 %v620
    %828 = vmatpush1.msra.mxu0 %v619
    %829 = vmatprep.subr.mxu0 %v627
    %830 = vmatpush1.msra.mxu0 %v626
    %831 = vmatprep.subr.mxu0 %v634
    %832 = vmatpush1.msra.mxu0 %v633
    %833 = vmatprep.subr.mxu0 %v641
    %834 = vmatpush1.msra.mxu0 %v640
    %835 = vmatprep.subr.mxu0 %v648
    %836 = vmatpush1.msra.mxu0 %v647
    %837 = vmatprep.subr.mxu0 %v655
    %838 = vmatpush1.msra.mxu0 %v654
    %839 = vmatprep.subr.mxu0 %v662
    %840 = vmatpush1.msra.mxu0 %v661
    %841 = vmatprep.subr.mxu0 %v669
    %842 = vmatpush1.msra.mxu0 %v668
    %843 = vmatprep.subr.mxu0 %v676
    %844 = vmatpush1.msra.mxu0 %v675
    %845 = vmatprep.subr.mxu0 %v683
    %846 = vmatpush1.msra.mxu0 %v682
    %847 = vmatprep.subr.mxu0 %v690
    %848 = vmatpush1.msra.mxu0 %v689
    %849 = vmatprep.subr.mxu0 %v697
    %850 = vmatpush1.msra.mxu0 %v696
    %851 = vmatprep.subr.mxu0 %v704
    %852 = vmatpush1.msra.mxu0 %v703
    %853 = vmatprep.subr.mxu0 %v711
    %854 = vmatpush1.msra.mxu0 %v710
    %855 = vmatprep.subr.mxu0 0.0
    %856 = vmatpush1.msra.mxu0 0.0
    %857 = vmatprep.subr.mxu0 0.0
    %858 = vmatpush1.msra.mxu0 0.0
    %859 = vmatprep.subr.mxu0 0.0
    %860 = vmatpush1.msra.mxu0 0.0
    %861 = vmatprep.subr.mxu0 0.0
    %862 = vmatpush1.msra.mxu0 0.0
    %863 = vmatprep.subr.mxu0 0.0
    %864 = vmatpush1.msra.mxu0 0.0
    %865 = vmatprep.subr.mxu0 0.0
    %866 = vmatpush1.msra.mxu0 0.0
    %867 = vmatprep.subr.mxu0 0.0
    %868 = vmatpush1.msra.mxu0 0.0
    %869 = vmatprep.subr.mxu0 0.0
    %870 = vmatpush1.msra.mxu0 0.0
    %871 = vmatprep.subr.mxu0 0.0
    %872 = vmatpush1.msra.mxu0 0.0
    %873 = vmatprep.subr.mxu0 0.0
    %874 = vmatpush1.msra.mxu0 0.0
    %875 = vmatprep.subr.mxu0 0.0
    %876 = vmatpush1.msra.mxu0 0.0
    %877 = vmatprep.subr.mxu0 0.0
    %878 = vmatpush1.msra.mxu0 0.0
    %879 = vmatprep.subr.mxu0 0.0
    %880 = vmatpush1.msra.mxu0 0.0
    %881 = vmatprep.subr.mxu0 0.0
    %882 = vmatpush1.msra.mxu0 0.0
    %883 = vmatprep.subr.mxu0 0.0
    %884 = vmatpush1.msra.mxu0 0.0
    %885 = vmatprep.subr.mxu0 0.0
    %886 = vmatpush1.msra.mxu0 0.0
    %887 = vmatprep.mubr.f32.mxu0 0.0
    %888 = vmatmul.mubr.f32.gmra.mrb[0].mxu0 %v602
    %v889 = vpop.f32.mrb[0].mxu0
    %v890 = vadd.f32 %v728, %v889
    %v891 = vpop.f32.mrb[0].mxu0
    %v892 = vadd.f32 %v732, %v891
    %893 = vdwg.mxu0
    %894 = vmatprep.subr.mxu0 %v608
    %895 = vmatpush1.msra.mxu0 %v607
    %896 = vmatprep.subr.mxu0 %v615
    %897 = vmatpush1.msra.mxu0 %v614
    %898 = vmatprep.subr.mxu0 %v622
    %899 = vmatpush1.msra.mxu0 %v621
    %900 = vmatprep.subr.mxu0 %v629
    %901 = vmatpush1.msra.mxu0 %v628
    %902 = vmatprep.subr.mxu0 %v636
    %903 = vmatpush1.msra.mxu0 %v635
    %904 = vmatprep.subr.mxu0 %v643
    %905 = vmatpush1.msra.mxu0 %v642
    %906 = vmatprep.subr.mxu0 %v650
    %907 = vmatpush1.msra.mxu0 %v649
    %908 = vmatprep.subr.mxu0 %v657
    %909 = vmatpush1.msra.mxu0 %v656
    %910 = vmatprep.subr.mxu0 %v664
    %911 = vmatpush1.msra.mxu0 %v663
    %912 = vmatprep.subr.mxu0 %v671
    %913 = vmatpush1.msra.mxu0 %v670
    %914 = vmatprep.subr.mxu0 %v678
    %915 = vmatpush1.msra.mxu0 %v677
    %916 = vmatprep.subr.mxu0 %v685
    %917 = vmatpush1.msra.mxu0 %v684
    %918 = vmatprep.subr.mxu0 %v692
    %919 = vmatpush1.msra.mxu0 %v691
    %920 = vmatprep.subr.mxu0 %v699
    %921 = vmatpush1.msra.mxu0 %v698
    %922 = vmatprep.subr.mxu0 %v706
    %923 = vmatpush1.msra.mxu0 %v705
    %924 = vmatprep.subr.mxu0 %v713
    %925 = vmatpush1.msra.mxu0 %v712
    %926 = vmatprep.subr.mxu0 0.0
    %927 = vmatpush1.msra.mxu0 0.0
    %928 = vmatprep.subr.mxu0 0.0
    %929 = vmatpush1.msra.mxu0 0.0
    %930 = vmatprep.subr.mxu0 0.0
    %931 = vmatpush1.msra.mxu0 0.0
    %932 = vmatprep.subr.mxu0 0.0
    %933 = vmatpush1.msra.mxu0 0.0
    %934 = vmatprep.subr.mxu0 0.0
    %935 = vmatpush1.msra.mxu0 0.0
    %936 = vmatprep.subr.mxu0 0.0
    %937 = vmatpush1.msra.mxu0 0.0
    %938 = vmatprep.subr.mxu0 0.0
    %939 = vmatpush1.msra.mxu0 0.0
    %940 = vmatprep.subr.mxu0 0.0
    %941 = vmatpush1.msra.mxu0 0.0
    %942 = vmatprep.subr.mxu0 0.0
    %943 = vmatpush1.msra.mxu0 0.0
    %944 = vmatprep.subr.mxu0 0.0
    %945 = vmatpush1.msra.mxu0 0.0
    %946 = vmatprep.subr.mxu0 0.0
    %947 = vmatpush1.msra.mxu0 0.0
    %948 = vmatprep.subr.mxu0 0.0
    %949 = vmatpush1.msra.mxu0 0.0
    %950 = vmatprep.subr.mxu0 0.0
    %951 = vmatpush1.msra.mxu0 0.0
    %952 = vmatprep.subr.mxu0 0.0
    %953 = vmatpush1.msra.mxu0 0.0
    %954 = vmatprep.subr.mxu0 0.0
    %955 = vmatpush1.msra.mxu0 0.0
    %956 = vmatprep.subr.mxu0 0.0
    %957 = vmatpush1.msra.mxu0 0.0
    %958 = vmatprep.mubr.f32.mxu0 0.0
    %959 = vmatmul.mubr.f32.gmra.mrb[0].mxu0 %v602
    %v960 = vpop.f32.mrb[0].mxu0
    %v961 = vadd.f32 %v736, %v960
    %v962 = vpop.f32.mrb[0].mxu0
    %v963 = vadd.f32 %v740, %v962
    %964 = vdwg.mxu0
    %965 = vmatprep.subr.mxu0 0.0
    %966 = vmatpush1.msra.mxu0 %v609
    %967 = vmatprep.subr.mxu0 0.0
    %968 = vmatpush1.msra.mxu0 %v616
    %969 = vmatprep.subr.mxu0 0.0
    %970 = vmatpush1.msra.mxu0 %v623
    %971 = vmatprep.subr.mxu0 0.0
    %972 = vmatpush1.msra.mxu0 %v630
    %973 = vmatprep.subr.mxu0 0.0
    %974 = vmatpush1.msra.mxu0 %v637
    %975 = vmatprep.subr.mxu0 0.0
    %976 = vmatpush1.msra.mxu0 %v644
    %977 = vmatprep.subr.mxu0 0.0
    %978 = vmatpush1.msra.mxu0 %v651
    %979 = vmatprep.subr.mxu0 0.0
    %980 = vmatpush1.msra.mxu0 %v658
    %981 = vmatprep.subr.mxu0 0.0
    %982 = vmatpush1.msra.mxu0 %v665
    %983 = vmatprep.subr.mxu0 0.0
    %984 = vmatpush1.msra.mxu0 %v672
    %985 = vmatprep.subr.mxu0 0.0
    %986 = vmatpush1.msra.mxu0 %v679
    %987 = vmatprep.subr.mxu0 0.0
    %988 = vmatpush1.msra.mxu0 %v686
    %989 = vmatprep.subr.mxu0 0.0
    %990 = vmatpush1.msra.mxu0 %v693
    %991 = vmatprep.subr.mxu0 0.0
    %992 = vmatpush1.msra.mxu0 %v700
    %993 = vmatprep.subr.mxu0 0.0
    %994 = vmatpush1.msra.mxu0 %v707
    %995 = vmatprep.subr.mxu0 0.0
    %996 = vmatpush1.msra.mxu0 %v714
    %997 = vmatprep.subr.mxu0 0.0
    %998 = vmatpush1.msra.mxu0 0.0
    %999 = vmatprep.subr.mxu0 0.0
    %1000 = vmatpush1.msra.mxu0 0.0
    %1001 = vmatprep.subr.mxu0 0.0
    %1002 = vmatpush1.msra.mxu0 0.0
    %1003 = vmatprep.subr.mxu0 0.0
    %1004 = vmatpush1.msra.mxu0 0.0
    %1005 = vmatprep.subr.mxu0 0.0
    %1006 = vmatpush1.msra.mxu0 0.0
    %1007 = vmatprep.subr.mxu0 0.0
    %1008 = vmatpush1.msra.mxu0 0.0
    %1009 = vmatprep.subr.mxu0 0.0
    %1010 = vmatpush1.msra.mxu0 0.0
    %1011 = vmatprep.subr.mxu0 0.0
    %1012 = vmatpush1.msra.mxu0 0.0
    %1013 = vmatprep.subr.mxu0 0.0
    %1014 = vmatpush1.msra.mxu0 0.0
    %1015 = vmatprep.subr.mxu0 0.0
    %1016 = vmatpush1.msra.mxu0 0.0
    %1017 = vmatprep.subr.mxu0 0.0
    %1018 = vmatpush1.msra.mxu0 0.0
    %1019 = vmatprep.subr.mxu0 0.0
    %1020 = vmatpush1.msra.mxu0 0.0
    %1021 = vmatprep.subr.mxu0 0.0
    %1022 = vmatpush1.msra.mxu0 0.0
    %1023 = vmatprep.subr.mxu0 0.0
    %1024 = vmatpush1.msra.mxu0 0.0
    %1025 = vmatprep.subr.mxu0 0.0
    %1026 = vmatpush1.msra.mxu0 0.0
    %1027 = vmatprep.subr.mxu0 0.0
    %1028 = vmatpush1.msra.mxu0 0.0
    %1029 = vmatprep.mubr.f32.mxu0 0.0
    %1030 = vmatmul.mubr.f32.gmra.mrb[0].mxu0 %v602
    %v1031 = vpop.f32.mrb[0].mxu0
    %v1032 = vadd.f32 %v744, %v1031
    %v1033 = vpop.f32.mrb[0].mxu0
    %1034 = vdwg.mxu0
    %v1042 = vcombine.low %v819, %v821
    %v1043 = vcombine.high %v819, %v821
    %v1044 = vcombine.low %v890, %v892
    %v1045 = vcombine.high %v890, %v892
    %v1047 = vunpack.c.l.s4 1983009808
    %v1048 = vunpack.c.0.s8 %v1047
    %v1049 = vlaneseq
    %v1050 = vshrl.u32 %v1049, 7
    %v1051 = vsub.s32 %v1048, %v1050
    %v1052 = vrot.slane %v1042, %v1051
    %v1054 = vunpack.c.l.s4 1983009808
    %v1055 = vunpack.c.0.s8 %v1054
    %v1056 = vlaneseq
    %v1057 = vshrl.u32 %v1056, 7
    %v1058 = vsub.s32 %v1055, %v1057
    %v1059 = vrot.slane %v1043, %v1058
    %v1061 = vunpack.c.l.s4 1983009808
    %v1062 = vunpack.c.0.s8 %v1061
    %v1063 = vlaneseq
    %v1064 = vshrl.u32 %v1063, 7
    %v1065 = vsub.s32 %v1062, %v1064
    %v1066 = vrot.slane %v1044, %v1065
    %v1068 = vunpack.c.l.s4 1983009808
    %v1069 = vunpack.c.0.s8 %v1068
    %v1070 = vlaneseq
    %v1071 = vshrl.u32 %v1070, 7
    %v1072 = vsub.s32 %v1069, %v1071
    %v1073 = vrot.slane %v1045, %v1072
    %v1074 = vcombine.low %v1052, %v1066
    %v1075 = vcombine.high %v1052, %v1066
    %v1076 = vcombine.low %v1059, %v1073
    %v1077 = vcombine.high %v1059, %v1073
    %v1078 = vcombine.low %v961, %v963
    %v1079 = vcombine.high %v961, %v963
    %v1080 = vcombine.high %v1032, %v1032
    %v1082 = vunpack.c.l.s4 1983009808
    %v1083 = vunpack.c.0.s8 %v1082
    %v1084 = vlaneseq
    %v1085 = vshrl.u32 %v1084, 7
    %v1086 = vsub.s32 %v1083, %v1085
    %v1087 = vrot.slane %v1078, %v1086
    %v1089 = vunpack.c.l.s4 1983009808
    %v1090 = vunpack.c.0.s8 %v1089
    %v1091 = vlaneseq
    %v1092 = vshrl.u32 %v1091, 7
    %v1093 = vsub.s32 %v1090, %v1092
    %v1094 = vrot.slane %v1079, %v1093
    %v1096 = vunpack.c.l.s4 1983009808
    %v1097 = vunpack.c.0.s8 %v1096
    %v1098 = vlaneseq
    %v1099 = vshrl.u32 %v1098, 7
    %v1100 = vsub.s32 %v1097, %v1099
    %v1101 = vrot.slane %v1032, %v1100
    %v1103 = vunpack.c.l.s4 1983009808
    %v1104 = vunpack.c.0.s8 %v1103
    %v1105 = vlaneseq
    %v1106 = vshrl.u32 %v1105, 7
    %v1107 = vsub.s32 %v1104, %v1106
    %v1108 = vrot.slane %v1080, %v1107
    %v1109 = vcombine.low %v1087, %v1101
    %v1110 = vcombine.high %v1087, %v1101
    %v1111 = vcombine.low %v1094, %v1108
    %v1112 = vcombine.high %v1094, %v1108
    %1121 = vst [vmem:[#allocation2] sm:$0xff] %v1074
    %vm1122 = vcmask 1041408
    %vm1123 = vcmask 1043458
    %vm1124 = vmor %vm1123, %vm1122
    %vm1125 = vcmask 128004
    %vm1126 = vmor %vm1125, %vm1124
    %1127 = vst.msk [vmem:[#allocation2 + $0x8] sm:$0x3f] %vm1126, %v1109
    %1128 = vst [vmem:[#allocation2 + $0xe] sm:$0xff] %v1075
    %1129 = vst.msk [vmem:[#allocation2 + $0x16] sm:$0x3f] %vm1126, %v1110
    %1130 = vst [vmem:[#allocation2 + $0x1c] sm:$0xff] %v1076
    %1131 = vst.msk [vmem:[#allocation2 + $0x24] sm:$0x3f] %vm1126, %v1111
    %1132 = vst [vmem:[#allocation2 + $0x2a] sm:$0xff] %v1077
    %1133 = vst.msk [vmem:[#allocation2 + $0x32] sm:$0x3f] %vm1126, %v1112
    // Predicated region
    $region30: #{tpu_custom_call.1} parent=1 // pred_check
      _
    $region31: #{tpu_custom_call.1} parent=1 // pred_check_branch
      %1135 = sbr.rel (0) target = $region33
    $region32: #{tpu_custom_call.1} parent=1 // pred_region
      %s1137 = ssub.s32 896, 224
      %1138 = vsyncadd [#allocation3], %s1137
      %s1139 = sshll.u32 [#allocation2], 4
      %s1140 = int_to_ptr.vmem [resolvable:$true] %s1139
      %1145 = dma.vmem_to_hbm [thread:$0]  %s1140, 224, %s7, [#allocation3], 224, 224, 14
    $region33: #{tpu_custom_call.1} parent=1 // pred_fallthru
      _
    // Predicated region
    $region34: #{tpu_custom_call.1} parent=1 // pred_check
      _
    $region35: #{tpu_custom_call.1} parent=1 // pred_check_branch
      %1147 = sbr.rel (0) target = $region37
    $region36: #{tpu_custom_call.1} parent=1 // pred_region
      %1148 = dma.done [#allocation3], 896
    $region37: #{tpu_custom_call.1} parent=1 // pred_fallthru
      _
    %1149 = vsyncpa [#allocation3], 1

</llo_original>
